<compile_context>
chip_gen: v7x
topology: tpu7x:2x2x1
jax: 0.10.0
libtpu: 0.0.40
codegen_flags: <defaults>
</compile_context>

<pallas_src>
import functools

import jax
import jax.numpy as jnp
from jax.experimental import pallas as pl
from jax.experimental.pallas import tpu as pltpu


def _conv_attention_kernel(x_ref, m_ref, w1_ref, w2_ref, w3_ref, out_ref,
                           col_ref, *, W, Cp, BL):
    """One batch-block per grid step; everything lane-dense.

    x_ref  : (Cp, BL)     channel-padded inputs, B images flattened on lanes
    m_ref  : (9*Cp, BL)   per-tap SAME-padding masks, pre-broadcast to Cp rows
    w1_ref : (Cp, 9*Cp)   conv1 weights, layout [cout, tap*Cp + cin]
    w2_ref : (Cp, 9*Cp)   conv2 weights
    w3_ref : (8, 9*Cp)    conv3 weights; row 0 real, rows 1..7 zero padding
    out_ref: (1, BL)      sigmoid attention map for this batch block
    col_ref: (9*Cp, BL)   VMEM scratch: im2col stack reused by all 3 layers
    """

    def build_im2col(feat):
        # Write the 9 shifted + border-masked taps straight into the scratch
        # band (write-then-dot caps vreg pressure; no 9-way concat of live
        # values).  Rolls use the XLU slot, mask multiplies the VPU; every
        # slice is Cp-sublane aligned so there are no relayouts.
        t = 0
        for dy in range(3):
            for dx in range(3):
                s = (dy - 1) * W + (dx - 1)          # flattened spatial offset
                if s == 0:
                    col_ref[t * Cp:(t + 1) * Cp, :] = feat   # center tap: valid
                else:
                    shifted = pltpu.roll(feat, (-s) % BL, axis=1)
                    col_ref[t * Cp:(t + 1) * Cp, :] = (
                        shifted * m_ref[t * Cp:(t + 1) * Cp, :])
                t += 1

    def lrelu(v):
        return jnp.where(v > 0, v, 0.2 * v)

    # conv1 + LeakyReLU : one lane-dense MXU matmul per layer.
    build_im2col(x_ref[...])
    a1 = lrelu(jnp.dot(w1_ref[...], col_ref[...],
                       preferred_element_type=jnp.float32))

    # conv2 + LeakyReLU
    build_im2col(a1)
    a2 = lrelu(jnp.dot(w2_ref[...], col_ref[...],
                       preferred_element_type=jnp.float32))

    # conv3 (Cout == 1): weights zero-padded to 8 sublane rows keep the dot
    # tile-aligned; only row 0 carries the real filter.
    build_im2col(a2)
    a3 = jnp.dot(w3_ref[...], col_ref[...],
                 preferred_element_type=jnp.float32)[0:1, :]

    # Sigmoid: exp goes to the EUP slot; exact divide keeps 1e-5 accuracy.
    out_ref[...] = (1.0 / (1.0 + jnp.exp(-a3))).astype(out_ref.dtype)


def conv_attention(x_nchw, w1_oihw, w2_oihw, w3_oihw, *, block_batch=None):
    """Pallas implementation of ConvAttention.forward. Returns NCHW (N,1,H,W)."""
    N, C, H, W = x_nchw.shape
    L = H * W
    Cp = ((C + 7) // 8) * 8          # pad channels to the f32 sublane tile

    # --- batch-block selection -------------------------------------------
    # Amortize the ~0.35-0.6 us per-step overhead by processing B images per
    # grid step, but keep >= 2 grid steps when N >= 2 so v7x's two TensorCores
    # both get work, and keep B*L modest so (blocks x2 buffers + masks x2 +
    # 9*Cp*B*L scratch) stays a few MiB (fits v7x's smaller VMEM with margin).
    if block_batch is None:
        max_lanes = 4096
        B = max(1, min(N, max_lanes // max(L, 1)))
        if N >= 2:
            B = min(B, -(-N // 2))   # ceil(N/2): keep at least 2 grid steps
    else:
        B = max(1, min(int(block_batch), N))
    G = -(-N // B)                   # grid length
    Np = G * B                       # padded batch
    BL = B * L

    # --- layout plumbing in plain JAX (free) ------------------------------
    x = x_nchw.astype(jnp.float32).reshape(N, C, L)
    if Np != N:
        x = jnp.pad(x, ((0, Np - N), (0, 0), (0, 0)))
    # (Np, C, L) -> (C, Np*L): image b occupies lanes [b*L, (b+1)*L)
    x = jnp.transpose(x, (1, 0, 2)).reshape(C, Np * L)
    x = jnp.pad(x, ((0, Cp - C), (0, 0)))                      # (Cp, Np*L)

    def pack_w(w_oihw, cout_pad):
        cout, cin = w_oihw.shape[:2]
        w = jnp.transpose(w_oihw.astype(jnp.float32), (0, 2, 3, 1))  # (O,3,3,I)
        w = jnp.pad(w, ((0, cout_pad - cout), (0, 0), (0, 0), (0, Cp - cin)))
        return w.reshape(cout_pad, 9 * Cp)      # [cout, (dy*3+dx)*Cp + cin]

    w1m = pack_w(w1_oihw, Cp)                   # (Cp, 9*Cp)
    w2m = pack_w(w2_oihw, Cp)                   # (Cp, 9*Cp)
    w3m = pack_w(w3_oihw, 8)                    # (8, 9*Cp), rows 1..7 zero

    # Per-tap border masks implementing "SAME" zero padding (they also kill
    # roll wrap-around and cross-image leakage within a batch block).
    # Pre-broadcast to Cp sublane rows so the kernel read is an aligned slice.
    ii = jnp.arange(L, dtype=jnp.int32)
    hh, ww = ii // W, ii % W
    mask_rows = []
    for dy in range(3):
        for dx in range(3):
            valid = ((hh + dy - 1 >= 0) & (hh + dy - 1 < H) &
                     (ww + dx - 1 >= 0) & (ww + dx - 1 < W))
            mask_rows.append(valid.astype(jnp.float32))
    masks = jnp.stack(mask_rows, axis=0)                               # (9, L)
    masks = jnp.broadcast_to(masks[:, None, :], (9, Cp, L)).reshape(9 * Cp, L)
    masks = jnp.tile(masks, (1, B))                                # (9*Cp, BL)

    kernel = functools.partial(_conv_attention_kernel, W=W, Cp=Cp, BL=BL)

    out = pl.pallas_call(
        kernel,
        out_shape=jax.ShapeDtypeStruct((1, Np * L), jnp.float32),
        grid=(G,),
        in_specs=[
            pl.BlockSpec((Cp, BL), lambda g: (0, g)),          # x block
            pl.BlockSpec((9 * Cp, BL), lambda g: (0, 0)),      # masks
            pl.BlockSpec((Cp, 9 * Cp), lambda g: (0, 0)),      # w1
            pl.BlockSpec((Cp, 9 * Cp), lambda g: (0, 0)),      # w2
            pl.BlockSpec((8, 9 * Cp), lambda g: (0, 0)),       # w3 (lane-dense)
        ],
        out_specs=pl.BlockSpec((1, BL), lambda g: (0, g)),
        scratch_shapes=[pltpu.VMEM((9 * Cp, BL), jnp.float32)],  # im2col scratch
        compiler_params=pltpu.CompilerParams(
            dimension_semantics=("parallel",)),   # v7x: shard blocks over 2 TCs
    )(x, masks, w1m, w2m, w3m)

    out = out.reshape(Np, L)[:N]                 # drop batch padding
    return out.reshape(N, 1, H, W)               # -> (N, 1, H, W)


def _reference(x_nchw, w1, w2, w3):
    """Pure-JAX NCHW/OIHW reference mirroring the PyTorch module."""
    dn = ("NCHW", "OIHW", "NCHW")

    def conv(x, w):
        return jax.lax.conv_general_dilated(
            x, w, window_strides=(1, 1), padding="SAME",
            dimension_numbers=dn)

    def lrelu(x):
        return jnp.where(x > 0, x, 0.2 * x)

    y = lrelu(conv(x_nchw, w1))
    y = lrelu(conv(y, w2))
    y = conv(y, w3)
    return jax.nn.sigmoid(y)


if __name__ == "__main__":
    N, C, H, W = 2, 4, 16, 16

    key = jax.random.PRNGKey(0)
    kx, k1, k2, k3 = jax.random.split(key, 4)

    x = jax.random.normal(kx, (N, C, H, W), dtype=jnp.float32)
    # Deterministic conv weights, PyTorch OIHW shapes, kaiming-ish scale.
    scale = 1.0 / (C * 9) ** 0.5
    w1 = scale * jax.random.normal(k1, (C, C, 3, 3), dtype=jnp.float32)
    w2 = scale * jax.random.normal(k2, (C, C, 3, 3), dtype=jnp.float32)
    w3 = scale * jax.random.normal(k3, (1, C, 3, 3), dtype=jnp.float32)

    out = conv_attention(x, w1, w2, w3)
    out = jax.block_until_ready(out)

    ref = jax.block_until_ready(_reference(x, w1, w2, w3))
    assert out.shape == (N, 1, H, W), out.shape
    assert bool(jnp.allclose(out, ref, atol=1e-5, rtol=1e-5)), "mismatch vs reference"

    print("KERNEL_OK")
</pallas_src>

<mosaic_0001>
module attributes {stable_mosaic.version = 11 : i64} {
  func.func @_conv_attention_kernel(%arg0: i32, %arg1: memref<8x256xf32, #tpu.memory_space<vmem>>, %arg2: memref<72x256xf32, #tpu.memory_space<vmem>>, %arg3: memref<8x72xf32, #tpu.memory_space<vmem>>, %arg4: memref<8x72xf32, #tpu.memory_space<vmem>>, %arg5: memref<8x72xf32, #tpu.memory_space<vmem>>, %arg6: memref<1x256xf32, #tpu.memory_space<vmem>>, %arg7: memref<72x256xf32, #tpu.memory_space<vmem>>) attributes {dimension_semantics = [#tpu.dimension_semantics<parallel>], iteration_bounds = array<i64: 2>, scalar_prefetch = 0 : i64, scratch_operands = 1 : i64, tpu.core_type = #tpu.core_type<tc>, window_params = [{transform_indices = @transform_0, window_bounds = array<i64: 8, 256>}, {pipeline_mode = #tpu.pipeline_mode<synchronous>, transform_indices = @transform_1, window_bounds = array<i64: 72, 256>}, {pipeline_mode = #tpu.pipeline_mode<synchronous>, transform_indices = @transform_2, window_bounds = array<i64: 8, 72>}, {pipeline_mode = #tpu.pipeline_mode<synchronous>, transform_indices = @transform_3, window_bounds = array<i64: 8, 72>}, {pipeline_mode = #tpu.pipeline_mode<synchronous>, transform_indices = @transform_4, window_bounds = array<i64: 8, 72>}, {transform_indices = @transform_5, window_bounds = array<i64: 1, 256>}]} {
    %c0 = arith.constant 0 : index
    %c0_0 = arith.constant 0 : index
    %0 = vector.load %arg1[%c0, %c0_0] : memref<8x256xf32, #tpu.memory_space<vmem>>, vector<8x256xf32>
    %c17_i32 = arith.constant 17 : i32
    %1 = tpu.dynamic_rotate %0 by %c17_i32 dim 1 : vector<8x256xf32>, i32 -> vector<8x256xf32>
    %c0_1 = arith.constant 0 : index
    %c0_2 = arith.constant 0 : index
    %2 = vector.load %arg2[%c0_1, %c0_2] : memref<72x256xf32, #tpu.memory_space<vmem>>, vector<8x256xf32>
    %3 = arith.mulf %1, %2 : vector<8x256xf32>
    %c0_3 = arith.constant 0 : index
    %c0_4 = arith.constant 0 : index
    %4 = vector.load %arg7[%c0_3, %c0_4] : memref<72x256xf32, #tpu.memory_space<vmem>>, vector<8x256xf32>
    tpu.vector_store %arg7[%c0_3, %c0_4], %3 {strides = array<i32>} : memref<72x256xf32, #tpu.memory_space<vmem>>, vector<8x256xf32>,
    %c16_i32 = arith.constant 16 : i32
    %5 = tpu.dynamic_rotate %0 by %c16_i32 dim 1 : vector<8x256xf32>, i32 -> vector<8x256xf32>
    %c8 = arith.constant 8 : index
    %c0_5 = arith.constant 0 : index
    %6 = vector.load %arg2[%c8, %c0_5] : memref<72x256xf32, #tpu.memory_space<vmem>>, vector<8x256xf32>
    %7 = arith.mulf %5, %6 : vector<8x256xf32>
    %c8_6 = arith.constant 8 : index
    %c0_7 = arith.constant 0 : index
    %8 = vector.load %arg7[%c8_6, %c0_7] : memref<72x256xf32, #tpu.memory_space<vmem>>, vector<8x256xf32>
    tpu.vector_store %arg7[%c8_6, %c0_7], %7 {strides = array<i32>} : memref<72x256xf32, #tpu.memory_space<vmem>>, vector<8x256xf32>,
    %c15_i32 = arith.constant 15 : i32
    %9 = tpu.dynamic_rotate %0 by %c15_i32 dim 1 : vector<8x256xf32>, i32 -> vector<8x256xf32>
    %c16 = arith.constant 16 : index
    %c0_8 = arith.constant 0 : index
    %10 = vector.load %arg2[%c16, %c0_8] : memref<72x256xf32, #tpu.memory_space<vmem>>, vector<8x256xf32>
    %11 = arith.mulf %9, %10 : vector<8x256xf32>
    %c16_9 = arith.constant 16 : index
    %c0_10 = arith.constant 0 : index
    %12 = vector.load %arg7[%c16_9, %c0_10] : memref<72x256xf32, #tpu.memory_space<vmem>>, vector<8x256xf32>
    tpu.vector_store %arg7[%c16_9, %c0_10], %11 {strides = array<i32>} : memref<72x256xf32, #tpu.memory_space<vmem>>, vector<8x256xf32>,
    %c1_i32 = arith.constant 1 : i32
    %13 = tpu.dynamic_rotate %0 by %c1_i32 dim 1 : vector<8x256xf32>, i32 -> vector<8x256xf32>
    %c24 = arith.constant 24 : index
    %c0_11 = arith.constant 0 : index
    %14 = vector.load %arg2[%c24, %c0_11] : memref<72x256xf32, #tpu.memory_space<vmem>>, vector<8x256xf32>
    %15 = arith.mulf %13, %14 : vector<8x256xf32>
    %c24_12 = arith.constant 24 : index
    %c0_13 = arith.constant 0 : index
    %16 = vector.load %arg7[%c24_12, %c0_13] : memref<72x256xf32, #tpu.memory_space<vmem>>, vector<8x256xf32>
    tpu.vector_store %arg7[%c24_12, %c0_13], %15 {strides = array<i32>} : memref<72x256xf32, #tpu.memory_space<vmem>>, vector<8x256xf32>,
    %c32 = arith.constant 32 : index
    %c0_14 = arith.constant 0 : index
    %17 = vector.load %arg7[%c32, %c0_14] : memref<72x256xf32, #tpu.memory_space<vmem>>, vector<8x256xf32>
    tpu.vector_store %arg7[%c32, %c0_14], %0 {strides = array<i32>} : memref<72x256xf32, #tpu.memory_space<vmem>>, vector<8x256xf32>,
    %c255_i32 = arith.constant 255 : i32
    %18 = tpu.dynamic_rotate %0 by %c255_i32 dim 1 : vector<8x256xf32>, i32 -> vector<8x256xf32>
    %c40 = arith.constant 40 : index
    %c0_15 = arith.constant 0 : index
    %19 = vector.load %arg2[%c40, %c0_15] : memref<72x256xf32, #tpu.memory_space<vmem>>, vector<8x256xf32>
    %20 = arith.mulf %18, %19 : vector<8x256xf32>
    %c40_16 = arith.constant 40 : index
    %c0_17 = arith.constant 0 : index
    %21 = vector.load %arg7[%c40_16, %c0_17] : memref<72x256xf32, #tpu.memory_space<vmem>>, vector<8x256xf32>
    tpu.vector_store %arg7[%c40_16, %c0_17], %20 {strides = array<i32>} : memref<72x256xf32, #tpu.memory_space<vmem>>, vector<8x256xf32>,
    %c241_i32 = arith.constant 241 : i32
    %22 = tpu.dynamic_rotate %0 by %c241_i32 dim 1 : vector<8x256xf32>, i32 -> vector<8x256xf32>
    %c48 = arith.constant 48 : index
    %c0_18 = arith.constant 0 : index
    %23 = vector.load %arg2[%c48, %c0_18] : memref<72x256xf32, #tpu.memory_space<vmem>>, vector<8x256xf32>
    %24 = arith.mulf %22, %23 : vector<8x256xf32>
    %c48_19 = arith.constant 48 : index
    %c0_20 = arith.constant 0 : index
    %25 = vector.load %arg7[%c48_19, %c0_20] : memref<72x256xf32, #tpu.memory_space<vmem>>, vector<8x256xf32>
    tpu.vector_store %arg7[%c48_19, %c0_20], %24 {strides = array<i32>} : memref<72x256xf32, #tpu.memory_space<vmem>>, vector<8x256xf32>,
    %c240_i32 = arith.constant 240 : i32
    %26 = tpu.dynamic_rotate %0 by %c240_i32 dim 1 : vector<8x256xf32>, i32 -> vector<8x256xf32>
    %c56 = arith.constant 56 : index
    %c0_21 = arith.constant 0 : index
    %27 = vector.load %arg2[%c56, %c0_21] : memref<72x256xf32, #tpu.memory_space<vmem>>, vector<8x256xf32>
    %28 = arith.mulf %26, %27 : vector<8x256xf32>
    %c56_22 = arith.constant 56 : index
    %c0_23 = arith.constant 0 : index
    %29 = vector.load %arg7[%c56_22, %c0_23] : memref<72x256xf32, #tpu.memory_space<vmem>>, vector<8x256xf32>
    tpu.vector_store %arg7[%c56_22, %c0_23], %28 {strides = array<i32>} : memref<72x256xf32, #tpu.memory_space<vmem>>, vector<8x256xf32>,
    %c239_i32 = arith.constant 239 : i32
    %30 = tpu.dynamic_rotate %0 by %c239_i32 dim 1 : vector<8x256xf32>, i32 -> vector<8x256xf32>
    %c64 = arith.constant 64 : index
    %c0_24 = arith.constant 0 : index
    %31 = vector.load %arg2[%c64, %c0_24] : memref<72x256xf32, #tpu.memory_space<vmem>>, vector<8x256xf32>
    %32 = arith.mulf %30, %31 : vector<8x256xf32>
    %c64_25 = arith.constant 64 : index
    %c0_26 = arith.constant 0 : index
    %33 = vector.load %arg7[%c64_25, %c0_26] : memref<72x256xf32, #tpu.memory_space<vmem>>, vector<8x256xf32>
    tpu.vector_store %arg7[%c64_25, %c0_26], %32 {strides = array<i32>} : memref<72x256xf32, #tpu.memory_space<vmem>>, vector<8x256xf32>,
    %c0_27 = arith.constant 0 : index
    %c0_28 = arith.constant 0 : index
    %34 = vector.load %arg3[%c0_27, %c0_28] : memref<8x72xf32, #tpu.memory_space<vmem>>, vector<8x72xf32>
    %c0_29 = arith.constant 0 : index
    %c0_30 = arith.constant 0 : index
    %35 = vector.load %arg7[%c0_29, %c0_30] : memref<72x256xf32, #tpu.memory_space<vmem>>, vector<72x256xf32>
    %cst = arith.constant dense<0.000000e+00> : vector<8x256xf32>
    %36 = tpu.matmul %34, %35, %cst {dimension_numbers = #tpu.dot_dimension_numbers<[1], [0], [0], [1], [0, 0, 1, 1], [], []>} : vector<8x72xf32>, vector<72x256xf32>, vector<8x256xf32> -> vector<8x256xf32>
    %cst_31 = arith.constant 0.000000e+00 : f32
    %37 = vector.broadcast %cst_31 : f32 to vector<8x256xf32>
    %38 = arith.cmpf ogt, %36, %37 : vector<8x256xf32>
    %cst_32 = arith.constant 2.000000e-01 : f32
    %39 = vector.broadcast %cst_32 : f32 to vector<8x256xf32>
    %40 = arith.mulf %39, %36 : vector<8x256xf32>
    %41 = arith.select %38, %36, %40 : vector<8x256xi1>, vector<8x256xf32>
    %c17_i32_33 = arith.constant 17 : i32
    %42 = tpu.dynamic_rotate %41 by %c17_i32_33 dim 1 : vector<8x256xf32>, i32 -> vector<8x256xf32>
    %c0_34 = arith.constant 0 : index
    %c0_35 = arith.constant 0 : index
    %43 = vector.load %arg2[%c0_34, %c0_35] : memref<72x256xf32, #tpu.memory_space<vmem>>, vector<8x256xf32>
    %44 = arith.mulf %42, %43 : vector<8x256xf32>
    %c0_36 = arith.constant 0 : index
    %c0_37 = arith.constant 0 : index
    %45 = vector.load %arg7[%c0_36, %c0_37] : memref<72x256xf32, #tpu.memory_space<vmem>>, vector<8x256xf32>
    tpu.vector_store %arg7[%c0_36, %c0_37], %44 {strides = array<i32>} : memref<72x256xf32, #tpu.memory_space<vmem>>, vector<8x256xf32>,
    %c16_i32_38 = arith.constant 16 : i32
    %46 = tpu.dynamic_rotate %41 by %c16_i32_38 dim 1 : vector<8x256xf32>, i32 -> vector<8x256xf32>
    %c8_39 = arith.constant 8 : index
    %c0_40 = arith.constant 0 : index
    %47 = vector.load %arg2[%c8_39, %c0_40] : memref<72x256xf32, #tpu.memory_space<vmem>>, vector<8x256xf32>
    %48 = arith.mulf %46, %47 : vector<8x256xf32>
    %c8_41 = arith.constant 8 : index
    %c0_42 = arith.constant 0 : index
    %49 = vector.load %arg7[%c8_41, %c0_42] : memref<72x256xf32, #tpu.memory_space<vmem>>, vector<8x256xf32>
    tpu.vector_store %arg7[%c8_41, %c0_42], %48 {strides = array<i32>} : memref<72x256xf32, #tpu.memory_space<vmem>>, vector<8x256xf32>,
    %c15_i32_43 = arith.constant 15 : i32
    %50 = tpu.dynamic_rotate %41 by %c15_i32_43 dim 1 : vector<8x256xf32>, i32 -> vector<8x256xf32>
    %c16_44 = arith.constant 16 : index
    %c0_45 = arith.constant 0 : index
    %51 = vector.load %arg2[%c16_44, %c0_45] : memref<72x256xf32, #tpu.memory_space<vmem>>, vector<8x256xf32>
    %52 = arith.mulf %50, %51 : vector<8x256xf32>
    %c16_46 = arith.constant 16 : index
    %c0_47 = arith.constant 0 : index
    %53 = vector.load %arg7[%c16_46, %c0_47] : memref<72x256xf32, #tpu.memory_space<vmem>>, vector<8x256xf32>
    tpu.vector_store %arg7[%c16_46, %c0_47], %52 {strides = array<i32>} : memref<72x256xf32, #tpu.memory_space<vmem>>, vector<8x256xf32>,
    %c1_i32_48 = arith.constant 1 : i32
    %54 = tpu.dynamic_rotate %41 by %c1_i32_48 dim 1 : vector<8x256xf32>, i32 -> vector<8x256xf32>
    %c24_49 = arith.constant 24 : index
    %c0_50 = arith.constant 0 : index
    %55 = vector.load %arg2[%c24_49, %c0_50] : memref<72x256xf32, #tpu.memory_space<vmem>>, vector<8x256xf32>
    %56 = arith.mulf %54, %55 : vector<8x256xf32>
    %c24_51 = arith.constant 24 : index
    %c0_52 = arith.constant 0 : index
    %57 = vector.load %arg7[%c24_51, %c0_52] : memref<72x256xf32, #tpu.memory_space<vmem>>, vector<8x256xf32>
    tpu.vector_store %arg7[%c24_51, %c0_52], %56 {strides = array<i32>} : memref<72x256xf32, #tpu.memory_space<vmem>>, vector<8x256xf32>,
    %c32_53 = arith.constant 32 : index
    %c0_54 = arith.constant 0 : index
    %58 = vector.load %arg7[%c32_53, %c0_54] : memref<72x256xf32, #tpu.memory_space<vmem>>, vector<8x256xf32>
    tpu.vector_store %arg7[%c32_53, %c0_54], %41 {strides = array<i32>} : memref<72x256xf32, #tpu.memory_space<vmem>>, vector<8x256xf32>,
    %c255_i32_55 = arith.constant 255 : i32
    %59 = tpu.dynamic_rotate %41 by %c255_i32_55 dim 1 : vector<8x256xf32>, i32 -> vector<8x256xf32>
    %c40_56 = arith.constant 40 : index
    %c0_57 = arith.constant 0 : index
    %60 = vector.load %arg2[%c40_56, %c0_57] : memref<72x256xf32, #tpu.memory_space<vmem>>, vector<8x256xf32>
    %61 = arith.mulf %59, %60 : vector<8x256xf32>
    %c40_58 = arith.constant 40 : index
    %c0_59 = arith.constant 0 : index
    %62 = vector.load %arg7[%c40_58, %c0_59] : memref<72x256xf32, #tpu.memory_space<vmem>>, vector<8x256xf32>
    tpu.vector_store %arg7[%c40_58, %c0_59], %61 {strides = array<i32>} : memref<72x256xf32, #tpu.memory_space<vmem>>, vector<8x256xf32>,
    %c241_i32_60 = arith.constant 241 : i32
    %63 = tpu.dynamic_rotate %41 by %c241_i32_60 dim 1 : vector<8x256xf32>, i32 -> vector<8x256xf32>
    %c48_61 = arith.constant 48 : index
    %c0_62 = arith.constant 0 : index
    %64 = vector.load %arg2[%c48_61, %c0_62] : memref<72x256xf32, #tpu.memory_space<vmem>>, vector<8x256xf32>
    %65 = arith.mulf %63, %64 : vector<8x256xf32>
    %c48_63 = arith.constant 48 : index
    %c0_64 = arith.constant 0 : index
    %66 = vector.load %arg7[%c48_63, %c0_64] : memref<72x256xf32, #tpu.memory_space<vmem>>, vector<8x256xf32>
    tpu.vector_store %arg7[%c48_63, %c0_64], %65 {strides = array<i32>} : memref<72x256xf32, #tpu.memory_space<vmem>>, vector<8x256xf32>,
    %c240_i32_65 = arith.constant 240 : i32
    %67 = tpu.dynamic_rotate %41 by %c240_i32_65 dim 1 : vector<8x256xf32>, i32 -> vector<8x256xf32>
    %c56_66 = arith.constant 56 : index
    %c0_67 = arith.constant 0 : index
    %68 = vector.load %arg2[%c56_66, %c0_67] : memref<72x256xf32, #tpu.memory_space<vmem>>, vector<8x256xf32>
    %69 = arith.mulf %67, %68 : vector<8x256xf32>
    %c56_68 = arith.constant 56 : index
    %c0_69 = arith.constant 0 : index
    %70 = vector.load %arg7[%c56_68, %c0_69] : memref<72x256xf32, #tpu.memory_space<vmem>>, vector<8x256xf32>
    tpu.vector_store %arg7[%c56_68, %c0_69], %69 {strides = array<i32>} : memref<72x256xf32, #tpu.memory_space<vmem>>, vector<8x256xf32>,
    %c239_i32_70 = arith.constant 239 : i32
    %71 = tpu.dynamic_rotate %41 by %c239_i32_70 dim 1 : vector<8x256xf32>, i32 -> vector<8x256xf32>
    %c64_71 = arith.constant 64 : index
    %c0_72 = arith.constant 0 : index
    %72 = vector.load %arg2[%c64_71, %c0_72] : memref<72x256xf32, #tpu.memory_space<vmem>>, vector<8x256xf32>
    %73 = arith.mulf %71, %72 : vector<8x256xf32>
    %c64_73 = arith.constant 64 : index
    %c0_74 = arith.constant 0 : index
    %74 = vector.load %arg7[%c64_73, %c0_74] : memref<72x256xf32, #tpu.memory_space<vmem>>, vector<8x256xf32>
    tpu.vector_store %arg7[%c64_73, %c0_74], %73 {strides = array<i32>} : memref<72x256xf32, #tpu.memory_space<vmem>>, vector<8x256xf32>,
    %c0_75 = arith.constant 0 : index
    %c0_76 = arith.constant 0 : index
    %75 = vector.load %arg4[%c0_75, %c0_76] : memref<8x72xf32, #tpu.memory_space<vmem>>, vector<8x72xf32>
    %c0_77 = arith.constant 0 : index
    %c0_78 = arith.constant 0 : index
    %76 = vector.load %arg7[%c0_77, %c0_78] : memref<72x256xf32, #tpu.memory_space<vmem>>, vector<72x256xf32>
    %cst_79 = arith.constant dense<0.000000e+00> : vector<8x256xf32>
    %77 = tpu.matmul %75, %76, %cst_79 {dimension_numbers = #tpu.dot_dimension_numbers<[1], [0], [0], [1], [0, 0, 1, 1], [], []>} : vector<8x72xf32>, vector<72x256xf32>, vector<8x256xf32> -> vector<8x256xf32>
    %cst_80 = arith.constant 0.000000e+00 : f32
    %78 = vector.broadcast %cst_80 : f32 to vector<8x256xf32>
    %79 = arith.cmpf ogt, %77, %78 : vector<8x256xf32>
    %cst_81 = arith.constant 2.000000e-01 : f32
    %80 = vector.broadcast %cst_81 : f32 to vector<8x256xf32>
    %81 = arith.mulf %80, %77 : vector<8x256xf32>
    %82 = arith.select %79, %77, %81 : vector<8x256xi1>, vector<8x256xf32>
    %c17_i32_82 = arith.constant 17 : i32
    %83 = tpu.dynamic_rotate %82 by %c17_i32_82 dim 1 : vector<8x256xf32>, i32 -> vector<8x256xf32>
    %c0_83 = arith.constant 0 : index
    %c0_84 = arith.constant 0 : index
    %84 = vector.load %arg2[%c0_83, %c0_84] : memref<72x256xf32, #tpu.memory_space<vmem>>, vector<8x256xf32>
    %85 = arith.mulf %83, %84 : vector<8x256xf32>
    %c0_85 = arith.constant 0 : index
    %c0_86 = arith.constant 0 : index
    %86 = vector.load %arg7[%c0_85, %c0_86] : memref<72x256xf32, #tpu.memory_space<vmem>>, vector<8x256xf32>
    tpu.vector_store %arg7[%c0_85, %c0_86], %85 {strides = array<i32>} : memref<72x256xf32, #tpu.memory_space<vmem>>, vector<8x256xf32>,
    %c16_i32_87 = arith.constant 16 : i32
    %87 = tpu.dynamic_rotate %82 by %c16_i32_87 dim 1 : vector<8x256xf32>, i32 -> vector<8x256xf32>
    %c8_88 = arith.constant 8 : index
    %c0_89 = arith.constant 0 : index
    %88 = vector.load %arg2[%c8_88, %c0_89] : memref<72x256xf32, #tpu.memory_space<vmem>>, vector<8x256xf32>
    %89 = arith.mulf %87, %88 : vector<8x256xf32>
    %c8_90 = arith.constant 8 : index
    %c0_91 = arith.constant 0 : index
    %90 = vector.load %arg7[%c8_90, %c0_91] : memref<72x256xf32, #tpu.memory_space<vmem>>, vector<8x256xf32>
    tpu.vector_store %arg7[%c8_90, %c0_91], %89 {strides = array<i32>} : memref<72x256xf32, #tpu.memory_space<vmem>>, vector<8x256xf32>,
    %c15_i32_92 = arith.constant 15 : i32
    %91 = tpu.dynamic_rotate %82 by %c15_i32_92 dim 1 : vector<8x256xf32>, i32 -> vector<8x256xf32>
    %c16_93 = arith.constant 16 : index
    %c0_94 = arith.constant 0 : index
    %92 = vector.load %arg2[%c16_93, %c0_94] : memref<72x256xf32, #tpu.memory_space<vmem>>, vector<8x256xf32>
    %93 = arith.mulf %91, %92 : vector<8x256xf32>
    %c16_95 = arith.constant 16 : index
    %c0_96 = arith.constant 0 : index
    %94 = vector.load %arg7[%c16_95, %c0_96] : memref<72x256xf32, #tpu.memory_space<vmem>>, vector<8x256xf32>
    tpu.vector_store %arg7[%c16_95, %c0_96], %93 {strides = array<i32>} : memref<72x256xf32, #tpu.memory_space<vmem>>, vector<8x256xf32>,
    %c1_i32_97 = arith.constant 1 : i32
    %95 = tpu.dynamic_rotate %82 by %c1_i32_97 dim 1 : vector<8x256xf32>, i32 -> vector<8x256xf32>
    %c24_98 = arith.constant 24 : index
    %c0_99 = arith.constant 0 : index
    %96 = vector.load %arg2[%c24_98, %c0_99] : memref<72x256xf32, #tpu.memory_space<vmem>>, vector<8x256xf32>
    %97 = arith.mulf %95, %96 : vector<8x256xf32>
    %c24_100 = arith.constant 24 : index
    %c0_101 = arith.constant 0 : index
    %98 = vector.load %arg7[%c24_100, %c0_101] : memref<72x256xf32, #tpu.memory_space<vmem>>, vector<8x256xf32>
    tpu.vector_store %arg7[%c24_100, %c0_101], %97 {strides = array<i32>} : memref<72x256xf32, #tpu.memory_space<vmem>>, vector<8x256xf32>,
    %c32_102 = arith.constant 32 : index
    %c0_103 = arith.constant 0 : index
    %99 = vector.load %arg7[%c32_102, %c0_103] : memref<72x256xf32, #tpu.memory_space<vmem>>, vector<8x256xf32>
    tpu.vector_store %arg7[%c32_102, %c0_103], %82 {strides = array<i32>} : memref<72x256xf32, #tpu.memory_space<vmem>>, vector<8x256xf32>,
    %c255_i32_104 = arith.constant 255 : i32
    %100 = tpu.dynamic_rotate %82 by %c255_i32_104 dim 1 : vector<8x256xf32>, i32 -> vector<8x256xf32>
    %c40_105 = arith.constant 40 : index
    %c0_106 = arith.constant 0 : index
    %101 = vector.load %arg2[%c40_105, %c0_106] : memref<72x256xf32, #tpu.memory_space<vmem>>, vector<8x256xf32>
    %102 = arith.mulf %100, %101 : vector<8x256xf32>
    %c40_107 = arith.constant 40 : index
    %c0_108 = arith.constant 0 : index
    %103 = vector.load %arg7[%c40_107, %c0_108] : memref<72x256xf32, #tpu.memory_space<vmem>>, vector<8x256xf32>
    tpu.vector_store %arg7[%c40_107, %c0_108], %102 {strides = array<i32>} : memref<72x256xf32, #tpu.memory_space<vmem>>, vector<8x256xf32>,
    %c241_i32_109 = arith.constant 241 : i32
    %104 = tpu.dynamic_rotate %82 by %c241_i32_109 dim 1 : vector<8x256xf32>, i32 -> vector<8x256xf32>
    %c48_110 = arith.constant 48 : index
    %c0_111 = arith.constant 0 : index
    %105 = vector.load %arg2[%c48_110, %c0_111] : memref<72x256xf32, #tpu.memory_space<vmem>>, vector<8x256xf32>
    %106 = arith.mulf %104, %105 : vector<8x256xf32>
    %c48_112 = arith.constant 48 : index
    %c0_113 = arith.constant 0 : index
    %107 = vector.load %arg7[%c48_112, %c0_113] : memref<72x256xf32, #tpu.memory_space<vmem>>, vector<8x256xf32>
    tpu.vector_store %arg7[%c48_112, %c0_113], %106 {strides = array<i32>} : memref<72x256xf32, #tpu.memory_space<vmem>>, vector<8x256xf32>,
    %c240_i32_114 = arith.constant 240 : i32
    %108 = tpu.dynamic_rotate %82 by %c240_i32_114 dim 1 : vector<8x256xf32>, i32 -> vector<8x256xf32>
    %c56_115 = arith.constant 56 : index
    %c0_116 = arith.constant 0 : index
    %109 = vector.load %arg2[%c56_115, %c0_116] : memref<72x256xf32, #tpu.memory_space<vmem>>, vector<8x256xf32>
    %110 = arith.mulf %108, %109 : vector<8x256xf32>
    %c56_117 = arith.constant 56 : index
    %c0_118 = arith.constant 0 : index
    %111 = vector.load %arg7[%c56_117, %c0_118] : memref<72x256xf32, #tpu.memory_space<vmem>>, vector<8x256xf32>
    tpu.vector_store %arg7[%c56_117, %c0_118], %110 {strides = array<i32>} : memref<72x256xf32, #tpu.memory_space<vmem>>, vector<8x256xf32>,
    %c239_i32_119 = arith.constant 239 : i32
    %112 = tpu.dynamic_rotate %82 by %c239_i32_119 dim 1 : vector<8x256xf32>, i32 -> vector<8x256xf32>
    %c64_120 = arith.constant 64 : index
    %c0_121 = arith.constant 0 : index
    %113 = vector.load %arg2[%c64_120, %c0_121] : memref<72x256xf32, #tpu.memory_space<vmem>>, vector<8x256xf32>
    %114 = arith.mulf %112, %113 : vector<8x256xf32>
    %c64_122 = arith.constant 64 : index
    %c0_123 = arith.constant 0 : index
    %115 = vector.load %arg7[%c64_122, %c0_123] : memref<72x256xf32, #tpu.memory_space<vmem>>, vector<8x256xf32>
    tpu.vector_store %arg7[%c64_122, %c0_123], %114 {strides = array<i32>} : memref<72x256xf32, #tpu.memory_space<vmem>>, vector<8x256xf32>,
    %c0_124 = arith.constant 0 : index
    %c0_125 = arith.constant 0 : index
    %116 = vector.load %arg5[%c0_124, %c0_125] : memref<8x72xf32, #tpu.memory_space<vmem>>, vector<8x72xf32>
    %c0_126 = arith.constant 0 : index
    %c0_127 = arith.constant 0 : index
    %117 = vector.load %arg7[%c0_126, %c0_127] : memref<72x256xf32, #tpu.memory_space<vmem>>, vector<72x256xf32>
    %cst_128 = arith.constant dense<0.000000e+00> : vector<8x256xf32>
    %118 = tpu.matmul %116, %117, %cst_128 {dimension_numbers = #tpu.dot_dimension_numbers<[1], [0], [0], [1], [0, 0, 1, 1], [], []>} : vector<8x72xf32>, vector<72x256xf32>, vector<8x256xf32> -> vector<8x256xf32>
    %119 = vector.extract_strided_slice %118 {offsets = [0, 0], sizes = [1, 256], strides = [1, 1]} : vector<8x256xf32> to vector<1x256xf32>
    %cst_129 = arith.constant 0.000000e+00 : f32
    %120 = vector.broadcast %cst_129 : f32 to vector<1x256xf32>
    %121 = arith.subf %120, %119 : vector<1x256xf32>
    %122 = math.exp %121 : vector<1x256xf32>
    %cst_130 = arith.constant 1.000000e+00 : f32
    %123 = vector.broadcast %cst_130 : f32 to vector<1x256xf32>
    %124 = arith.addf %123, %122 : vector<1x256xf32>
    %cst_131 = arith.constant 1.000000e+00 : f32
    %125 = vector.broadcast %cst_131 : f32 to vector<1x256xf32>
    %126 = arith.divf %125, %124 : vector<1x256xf32>
    %c0_132 = arith.constant 0 : index
    %c0_133 = arith.constant 0 : index
    %127 = vector.load %arg6[%c0_132, %c0_133] : memref<1x256xf32, #tpu.memory_space<vmem>>, vector<1x256xf32>
    tpu.vector_store %arg6[%c0_132, %c0_133], %126 {strides = array<i32>} : memref<1x256xf32, #tpu.memory_space<vmem>>, vector<1x256xf32>,
    return
  }
  func.func @transform_0(%arg0: i32) -> (i32, i32) {
    %c0_i32 = arith.constant 0 : i32
    %c0_i32_0 = arith.constant 0 : i32
    return %c0_i32, %arg0 : i32, i32
  }
  func.func @transform_1(%arg0: i32) -> (i32, i32) {
    %c0_i32 = arith.constant 0 : i32
    %c0_i32_0 = arith.constant 0 : i32
    %c0_i32_1 = arith.constant 0 : i32
    return %c0_i32, %c0_i32_0 : i32, i32
  }
  func.func @transform_2(%arg0: i32) -> (i32, i32) {
    %c0_i32 = arith.constant 0 : i32
    %c0_i32_0 = arith.constant 0 : i32
    %c0_i32_1 = arith.constant 0 : i32
    return %c0_i32, %c0_i32_0 : i32, i32
  }
  func.func @transform_3(%arg0: i32) -> (i32, i32) {
    %c0_i32 = arith.constant 0 : i32
    %c0_i32_0 = arith.constant 0 : i32
    %c0_i32_1 = arith.constant 0 : i32
    return %c0_i32, %c0_i32_0 : i32, i32
  }
  func.func @transform_4(%arg0: i32) -> (i32, i32) {
    %c0_i32 = arith.constant 0 : i32
    %c0_i32_0 = arith.constant 0 : i32
    %c0_i32_1 = arith.constant 0 : i32
    return %c0_i32, %c0_i32_0 : i32, i32
  }
  func.func @transform_5(%arg0: i32) -> (i32, i32) {
    %c0_i32 = arith.constant 0 : i32
    %c0_i32_0 = arith.constant 0 : i32
    return %c0_i32, %arg0 : i32, i32
  }
}

</mosaic_0001>

<llo_original>
// kernel: tpu_custom_call.1
$region0: #{tpu_custom_call.1}
  #allocation0 [shape = 'u32[]', space=smem, size = 0x4, offset = 0x4, fixed_abs, tag = 'smem constant byte address 0x4 - core index']
  #allocation1 [shape = 'u32[144,128]{1,0:T(1,128)}', space=vmem, size = 0x12000, scoped, tag = 'internal scratch']
  #allocation2 [shape = 'f32[72,256]{1,0:T(8,128)}', space=vmem, size = 0x12000, scoped, tag = 'scratch operand']
  %s0 = inlined_call_operand.hbm [shape: f32[8,512], index: 0, kind: input, shape index: {}]
  %s1 = inlined_call_operand.hbm [shape: f32[72,256], index: 1, kind: input, shape index: {}]
  %s2 = inlined_call_operand.hbm [shape: f32[8,72], index: 2, kind: input, shape index: {}]
  %s3 = inlined_call_operand.vmem [shape: f32[8,72], index: 3, kind: input, shape index: {}]
  %s4 = inlined_call_operand.hbm [shape: f32[8,72], index: 4, kind: input, shape index: {}]
  %s5 = inlined_call_operand.hbm [shape: f32[1,512], index: 5, kind: output, shape index: {}]
  %s6 = sld [smem:[#allocation0]]
  $region69: #{tpu_custom_call.1} parent=0
    _
  %s8 = ssub.s32 1, %s6
  %s9 = scalar_select 0, %s8, %s6
  $region1: #{tpu_custom_call.1} parent=0
    #allocation3 [shape = 'u8[16384]{0}', space=vmem, size = 0x4000, scoped, tag = 'input window, operand 0']
    #allocation4 [shape = 's32[2]{0}', space=sflag, size = 0x8, scoped, tag = 'scoped memory for tpu_custom_call.1']
    #allocation5 [shape = 's32[2]{0}', space=sflag, size = 0x8, scoped, tag = 'scoped memory for tpu_custom_call.1']
    #allocation6 [shape = 'u8[73728]{0}', space=vmem, size = 0x12000, scoped, tag = 'input window, operand 1, single buffered']
    #allocation7 [shape = 's32[1]{0}', space=sflag, size = 0x4, scoped, tag = 'scoped memory for tpu_custom_call.1']
    #allocation8 [shape = 'u8[4096]{0}', space=vmem, size = 0x1000, scoped, tag = 'input window, operand 2, single buffered']
    #allocation9 [shape = 'u8[4096]{0}', space=vmem, size = 0x1000, scoped, tag = 'input window, operand 4, single buffered']
    #allocation10 [shape = 's32[1]{0}', space=sflag, size = 0x4, scoped, tag = 'scoped memory for tpu_custom_call.1']
    #allocation11 [shape = 'u8[2048]{0}', space=vmem, size = 0x800, scoped, tag = 'output window, operand 0']
    %10 = vsyncpa [#allocation4], 0
    %s11 = scalar_lea.sflag [#allocation4], 1
    %12 = vsyncpa %s11, 0
    %13 = vsyncpa [#allocation7], 0
    %14 = vsyncpa [#allocation10], 0
    %15 = vsyncpa [#allocation5], 0
    %s16 = scalar_lea.sflag [#allocation5], 1
    %17 = vsyncpa %s16, 0
    loop: start=0, step=1, limit=4
    $region2: #{tpu_custom_call.1} parent=1 // loop_pre_header
      _
    $region3: #{tpu_custom_call.1} parent=1 // loop_header
      %s19 = sphi 0, %s23
      %p20 = scmp.ge.s32.totalorder %s19, 4
      %s29 = sphi 0, %s31
      %s32 = sphi 0, %s29
      %s33 = sphi 0, %s32
      %s49 = sphi 0, %s33
      %s53 = sphi 0, %s53
      %s55 = sphi 0, %s53
      %s56 = sphi 0, %s55
      %s70 = sphi 0, %s56
      %s74 = sphi 0, %s74
      %s76 = sphi 0, %s74
      %s77 = sphi 0, %s76
      %s91 = sphi 0, %s77
      %s95 = sphi 0, %s95
      %s97 = sphi 0, %s95
      %s98 = sphi 0, %s97
      %s112 = sphi 0, %s98
      %s116 = sphi 0, %s116
      %s118 = sphi 0, %s116
      %s119 = sphi 0, %s118
      %s133 = sphi 0, %s119
      %s139 = sphi 0, %s141
      %s142 = sphi 0, %s139
      %s143 = sphi 0, %s142
      %s159 = sphi 0, %s143
    $region4: #{tpu_custom_call.1} parent=1 // loop_header_branch
      %22 = sbr.rel (%p20) target = $region8
    $region5: #{tpu_custom_call.1} parent=1 // loop_body
      %s24 = ssub.s32 %s19, 1
      %s25 = ssub.s32 %s19, 2
      %s26 = sadd.s32 %s19, 1
      %s27 = ssub.s32 %s19, %s26
      %p28 = scmp.eq.s32.totalorder %s27, 0
      %s30 = sadd.s32 %s29, 1
      %s31 = scalar_select %p28, %s29, %s30
      %p34 = pneg %p28
      %p35 = scmp.eq.s32.totalorder %s19, 1
      %p36 = por %p34, %p35
      %p37 = scmp.ne.s32.totalorder %s29, %s32
      %p38 = scmp.eq.s32.totalorder %s19, 0
      %p39 = por %p37, %p38
      %p40 = scmp.ne.s32.totalorder %s29, %s32
      %p41 = scmp.eq.s32.totalorder %s24, 1
      %p42 = por %p40, %p41
      %p43 = scmp.ne.s32.totalorder %s32, %s33
      %p44 = scmp.eq.s32.totalorder %s24, 0
      %p45 = por %p43, %p44
      %p46 = scmp.ne.s32.totalorder %s32, %s33
      %p47 = scmp.eq.s32.totalorder %s25, 1
      %p48 = por %p46, %p47
      %p50 = scmp.ne.s32.totalorder %s33, %s49
      %p51 = scmp.eq.s32.totalorder %s25, 0
      %p52 = por %p50, %p51
      %s54 = sadd.s32 %s53, 1
      %p57 = scmp.eq.s32.totalorder %s19, 1
      %p58 = scmp.ne.s32.totalorder %s53, %s55
      %p59 = scmp.eq.s32.totalorder %s19, 0
      %p60 = por %p58, %p59
      %p61 = scmp.ne.s32.totalorder %s53, %s55
      %p62 = scmp.eq.s32.totalorder %s24, 1
      %p63 = por %p61, %p62
      %p64 = scmp.ne.s32.totalorder %s55, %s56
      %p65 = scmp.eq.s32.totalorder %s24, 0
      %p66 = por %p64, %p65
      %p67 = scmp.ne.s32.totalorder %s55, %s56
      %p68 = scmp.eq.s32.totalorder %s25, 1
      %p69 = por %p67, %p68
      %p71 = scmp.ne.s32.totalorder %s56, %s70
      %p72 = scmp.eq.s32.totalorder %s25, 0
      %p73 = por %p71, %p72
      %s75 = sadd.s32 %s74, 1
      %p78 = scmp.eq.s32.totalorder %s19, 1
      %p79 = scmp.ne.s32.totalorder %s74, %s76
      %p80 = scmp.eq.s32.totalorder %s19, 0
      %p81 = por %p79, %p80
      %p82 = scmp.ne.s32.totalorder %s74, %s76
      %p83 = scmp.eq.s32.totalorder %s24, 1
      %p84 = por %p82, %p83
      %p85 = scmp.ne.s32.totalorder %s76, %s77
      %p86 = scmp.eq.s32.totalorder %s24, 0
      %p87 = por %p85, %p86
      %p88 = scmp.ne.s32.totalorder %s76, %s77
      %p89 = scmp.eq.s32.totalorder %s25, 1
      %p90 = por %p88, %p89
      %p92 = scmp.ne.s32.totalorder %s77, %s91
      %p93 = scmp.eq.s32.totalorder %s25, 0
      %p94 = por %p92, %p93
      %s96 = sadd.s32 %s95, 1
      %p99 = scmp.eq.s32.totalorder %s19, 1
      %p100 = scmp.ne.s32.totalorder %s95, %s97
      %p101 = scmp.eq.s32.totalorder %s19, 0
      %p102 = por %p100, %p101
      %p103 = scmp.ne.s32.totalorder %s95, %s97
      %p104 = scmp.eq.s32.totalorder %s24, 1
      %p105 = por %p103, %p104
      %p106 = scmp.ne.s32.totalorder %s97, %s98
      %p107 = scmp.eq.s32.totalorder %s24, 0
      %p108 = por %p106, %p107
      %p109 = scmp.ne.s32.totalorder %s97, %s98
      %p110 = scmp.eq.s32.totalorder %s25, 1
      %p111 = por %p109, %p110
      %p113 = scmp.ne.s32.totalorder %s98, %s112
      %p114 = scmp.eq.s32.totalorder %s25, 0
      %p115 = por %p113, %p114
      %s117 = sadd.s32 %s116, 1
      %p120 = scmp.eq.s32.totalorder %s19, 1
      %p121 = scmp.ne.s32.totalorder %s116, %s118
      %p122 = scmp.eq.s32.totalorder %s19, 0
      %p123 = por %p121, %p122
      %p124 = scmp.ne.s32.totalorder %s116, %s118
      %p125 = scmp.eq.s32.totalorder %s24, 1
      %p126 = por %p124, %p125
      %p127 = scmp.ne.s32.totalorder %s118, %s119
      %p128 = scmp.eq.s32.totalorder %s24, 0
      %p129 = por %p127, %p128
      %p130 = scmp.ne.s32.totalorder %s118, %s119
      %p131 = scmp.eq.s32.totalorder %s25, 1
      %p132 = por %p130, %p131
      %p134 = scmp.ne.s32.totalorder %s119, %s133
      %p135 = scmp.eq.s32.totalorder %s25, 0
      %p136 = por %p134, %p135
      %s137 = ssub.s32 %s19, %s26
      %p138 = scmp.eq.s32.totalorder %s137, 0
      %s140 = sadd.s32 %s139, 1
      %s141 = scalar_select %p138, %s139, %s140
      %p144 = pneg %p138
      %p145 = scmp.eq.s32.totalorder %s19, 1
      %p146 = por %p144, %p145
      %p147 = scmp.ne.s32.totalorder %s139, %s142
      %p148 = scmp.eq.s32.totalorder %s19, 0
      %p149 = por %p147, %p148
      %p150 = scmp.ne.s32.totalorder %s139, %s142
      %p151 = scmp.eq.s32.totalorder %s24, 1
      %p152 = por %p150, %p151
      %p153 = scmp.ne.s32.totalorder %s142, %s143
      %p154 = scmp.eq.s32.totalorder %s24, 0
      %p155 = por %p153, %p154
      %p156 = scmp.ne.s32.totalorder %s142, %s143
      %p157 = scmp.eq.s32.totalorder %s25, 1
      %p158 = por %p156, %p157
      %p160 = scmp.ne.s32.totalorder %s143, %s159
      %p161 = scmp.eq.s32.totalorder %s25, 0
      %p162 = por %p160, %p161
      %p163 = scmp.le.s32.totalorder 1, %s19
      %p164 = scmp.lt.s32.totalorder %s19, 3
      %p165 = pnand %p163, %p164
      %p166 = pneg %p165
      // Predicated region
      $region9: #{tpu_custom_call.1} parent=5 // pred_check
        _
      $region10: #{tpu_custom_call.1} parent=5 // pred_check_branch
        %168 = sbr.rel (%p165) target = $region12
      $region11: #{tpu_custom_call.1} parent=5 // pred_region
        %s169 = ssub.s32 %s19, 1
        // Predicated region
        $region13: #{tpu_custom_call.1} parent=11 // pred_check
          %p170 = pneg %p66
        $region14: #{tpu_custom_call.1} parent=11 // pred_check_branch
          %172 = sbr.rel (%p170) target = $region16
        $region15: #{tpu_custom_call.1} parent=11 // pred_region
          %s174 = ssub.s32 2304, 2304
          %175 = vsyncadd [#allocation7], %s174
          %s176 = sshll.u32 [#allocation6], 4
          %s177 = int_to_ptr.vmem [resolvable:$true] %s176
          %182 = dma.hbm_to_vmem [thread:$0]  %s1, 2304, %s177, [#allocation7], 256, 256, 16
        $region16: #{tpu_custom_call.1} parent=11 // pred_fallthru
          _
        // Predicated region
        $region17: #{tpu_custom_call.1} parent=11 // pred_check
          %p183 = pneg %p87
        $region18: #{tpu_custom_call.1} parent=11 // pred_check_branch
          %185 = sbr.rel (%p183) target = $region20
        $region19: #{tpu_custom_call.1} parent=11 // pred_region
          %s187 = ssub.s32 128, 128
          %188 = vsyncadd [#allocation7], %s187
          %s190 = sshll.u32 [#allocation8], 4
          %s191 = int_to_ptr.vmem [resolvable:$true] %s190
          %193 = dma.hbm_to_vmem [thread:$0]  %s2, 128, %s191, [#allocation7]
        $region20: #{tpu_custom_call.1} parent=11 // pred_fallthru
          _
        // Predicated region
        $region21: #{tpu_custom_call.1} parent=11 // pred_check
          %p194 = pneg %p108
        $region22: #{tpu_custom_call.1} parent=11 // pred_check_branch
          %196 = sbr.rel (%p194) target = $region24
        $region23: #{tpu_custom_call.1} parent=11 // pred_region
          _
        $region24: #{tpu_custom_call.1} parent=11 // pred_fallthru
          _
        // Predicated region
        $region25: #{tpu_custom_call.1} parent=11 // pred_check
          %p197 = pneg %p129
        $region26: #{tpu_custom_call.1} parent=11 // pred_check_branch
          %199 = sbr.rel (%p197) target = $region28
        $region27: #{tpu_custom_call.1} parent=11 // pred_region
          %s201 = ssub.s32 128, 128
          %202 = vsyncadd [#allocation10], %s201
          %s204 = sshll.u32 [#allocation9], 4
          %s205 = int_to_ptr.vmem [resolvable:$true] %s204
          %207 = dma.hbm_to_vmem [thread:$0]  %s4, 128, %s205, [#allocation10]
        $region28: #{tpu_custom_call.1} parent=11 // pred_fallthru
          _
      $region12: #{tpu_custom_call.1} parent=5 // pred_fallthru
        _
      %p208 = scmp.lt.s32.totalorder %s19, 2
      // Predicated region
      $region29: #{tpu_custom_call.1} parent=5 // pred_check
        %p209 = pneg %p208
      $region30: #{tpu_custom_call.1} parent=5 // pred_check_branch
        %211 = sbr.rel (%p209) target = $region32
      $region31: #{tpu_custom_call.1} parent=5 // pred_region
        // Predicated region
        $region33: #{tpu_custom_call.1} parent=31 // pred_check
          %p212 = pneg %p39
        $region34: #{tpu_custom_call.1} parent=31 // pred_check_branch
          %214 = sbr.rel (%p212) target = $region36
        $region35: #{tpu_custom_call.1} parent=31 // pred_region
          %s215 = sand.u32 %s29, 1
          %s216 = scalar_lea.sflag [#allocation4], %s215
          %s217 = sand.u32 %s29, 1
          %s218 = smul.addr %s217, 16
          %s219 = scalar_lea.vmem [#allocation3], %s218
          %s220 = smul.u32 2, %s19
          %s222 = ssub.s32 256, 256
          %223 = vsyncadd %s216, %s222
          %s224 = smul.addr %s220, 128
          %s225 = scalar_lea.hbm %s0, %s224
          %s227 = sshll.u32 %s219, 4
          %s228 = int_to_ptr.vmem [resolvable:$true] %s227
          %230 = dma.hbm_to_vmem [thread:$0]  %s225, 256, %s228, %s216
        $region36: #{tpu_custom_call.1} parent=31 // pred_fallthru
          _
      $region32: #{tpu_custom_call.1} parent=5 // pred_fallthru
        _
      %p231 = scmp.le.s32.totalorder 1, %s19
      %p232 = scmp.lt.s32.totalorder %s19, 3
      %p233 = pnand %p231, %p232
      %p234 = pneg %p233
      // Predicated region
      $region37: #{tpu_custom_call.1} parent=5 // pred_check
        _
      $region38: #{tpu_custom_call.1} parent=5 // pred_check_branch
        %236 = sbr.rel (%p233) target = $region40
      $region39: #{tpu_custom_call.1} parent=5 // pred_region
        %s237 = ssub.s32 %s19, 1
        %s238 = sand.u32 %s32, 1
        %s239 = scalar_lea.sflag [#allocation4], %s238
        %s240 = sand.u32 %s32, 1
        %s241 = smul.addr %s240, 16
        %s242 = scalar_lea.vmem [#allocation3], %s241
        // Predicated region
        $region41: #{tpu_custom_call.1} parent=39 // pred_check
          %p243 = pneg %p45
        $region42: #{tpu_custom_call.1} parent=39 // pred_check_branch
          %245 = sbr.rel (%p243) target = $region44
        $region43: #{tpu_custom_call.1} parent=39 // pred_region
          %246 = dma.done %s239, 256
        $region44: #{tpu_custom_call.1} parent=39 // pred_fallthru
          _
        // Predicated region
        $region45: #{tpu_custom_call.1} parent=39 // pred_check
          %p247 = pneg %p66
        $region46: #{tpu_custom_call.1} parent=39 // pred_check_branch
          %249 = sbr.rel (%p247) target = $region48
        $region47: #{tpu_custom_call.1} parent=39 // pred_region
          %250 = dma.done [#allocation7], 2304
        $region48: #{tpu_custom_call.1} parent=39 // pred_fallthru
          _
        // Predicated region
        $region49: #{tpu_custom_call.1} parent=39 // pred_check
          %p251 = pneg %p87
        $region50: #{tpu_custom_call.1} parent=39 // pred_check_branch
          %253 = sbr.rel (%p251) target = $region52
        $region51: #{tpu_custom_call.1} parent=39 // pred_region
          %254 = dma.done [#allocation7], 128
        $region52: #{tpu_custom_call.1} parent=39 // pred_fallthru
          _
        // Predicated region
        $region53: #{tpu_custom_call.1} parent=39 // pred_check
          %p255 = pneg %p129
        $region54: #{tpu_custom_call.1} parent=39 // pred_check_branch
          %257 = sbr.rel (%p255) target = $region56
        $region55: #{tpu_custom_call.1} parent=39 // pred_region
          %258 = dma.done [#allocation10], 128
        $region56: #{tpu_custom_call.1} parent=39 // pred_fallthru
          _
        %s259 = sand.u32 %s32, 1
        %s260 = scalar_lea.sflag [#allocation4], %s259
        %s261 = sand.u32 %s32, 1
        %s262 = smul.addr %s261, 16
        %s263 = scalar_lea.vmem [#allocation3], %s262
        %p264 = pneg %p45
        %p265 = pneg %p42
        %p266 = pneg %p66
        %p267 = pneg %p63
        %p268 = pneg %p87
        %p269 = pneg %p84
        %p270 = pneg %p108
        %p271 = pneg %p105
        %p272 = pneg %p129
        %p273 = pneg %p126
        %p274 = pneg %p155
        %p275 = pneg %p152
        %s276 = sand.u32 %s142, 1
        %s277 = scalar_lea.sflag [#allocation5], %s276
        %s278 = sand.u32 %s142, 1
        %s279 = smul.addr %s278, 2
        %s280 = scalar_lea.vmem [#allocation11], %s279
        %s281 = smul.u32 2, %s24
        %s282 = smul.u32 2, %s24
        %v283 = vld [vmem:[%s242] sm:$0xff]
        %v284 = vld [vmem:[%s242 + $0x8] sm:$0xff]
        %285 = vrot.lane.b32.xlu0 %v283, 17
        %v286 = vpop.permute.xlu0 %285
        %287 = vrot.lane.b32.xlu0 %v284, 17
        %v288 = vpop.permute.xlu0 %287
        %v289 = vlaneseq
        %v290 = vand.u32 %v289, 127
        %vm291 = vcmp.lt.s32.totalorder %v290, 17
        %v292 = vsel %vm291, %v286, %v288
        %v293 = vsel %vm291, %v288, %v286
        %v294 = vld [vmem:[#allocation6] sm:$0xff]
        %v295 = vld [vmem:[#allocation6 + $0x8] sm:$0xff]
        %v296 = vmul.f32 %v293, %v294
        %v297 = vmul.f32 %v292, %v295
        %298 = vst [vmem:[#allocation2] sm:$0xff] %v296
        %299 = vst [vmem:[#allocation2 + $0x8] sm:$0xff] %v297
        %300 = vrot.lane.b32.xlu0 %v283, 16
        %v301 = vpop.permute.xlu0 %300
        %302 = vrot.lane.b32.xlu0 %v284, 16
        %v303 = vpop.permute.xlu0 %302
        %vm304 = vcmp.lt.s32.totalorder %v290, 16
        %v305 = vsel %vm304, %v301, %v303
        %v306 = vsel %vm304, %v303, %v301
        %v307 = vld [vmem:[#allocation6 + $0x10] sm:$0xff]
        %v308 = vld [vmem:[#allocation6 + $0x18] sm:$0xff]
        %v309 = vmul.f32 %v306, %v307
        %v310 = vmul.f32 %v305, %v308
        %311 = vst [vmem:[#allocation2 + $0x10] sm:$0xff] %v309
        %312 = vst [vmem:[#allocation2 + $0x18] sm:$0xff] %v310
        %313 = vrot.lane.b32.xlu0 %v283, 15
        %v314 = vpop.permute.xlu0 %313
        %315 = vrot.lane.b32.xlu0 %v284, 15
        %v316 = vpop.permute.xlu0 %315
        %vm317 = vcmp.lt.s32.totalorder %v290, 15
        %v318 = vsel %vm317, %v314, %v316
        %v319 = vsel %vm317, %v316, %v314
        %v320 = vld [vmem:[#allocation6 + $0x20] sm:$0xff]
        %v321 = vld [vmem:[#allocation6 + $0x28] sm:$0xff]
        %v322 = vmul.f32 %v319, %v320
        %v323 = vmul.f32 %v318, %v321
        %324 = vst [vmem:[#allocation2 + $0x20] sm:$0xff] %v322
        %325 = vst [vmem:[#allocation2 + $0x28] sm:$0xff] %v323
        %326 = vrot.lane.b32.xlu0 %v283, 1
        %v327 = vpop.permute.xlu0 %326
        %328 = vrot.lane.b32.xlu0 %v284, 1
        %v329 = vpop.permute.xlu0 %328
        %vm330 = vcmp.lt.s32.totalorder %v290, 1
        %v331 = vsel %vm330, %v327, %v329
        %v332 = vsel %vm330, %v329, %v327
        %v333 = vld [vmem:[#allocation6 + $0x30] sm:$0xff]
        %v334 = vld [vmem:[#allocation6 + $0x38] sm:$0xff]
        %v335 = vmul.f32 %v332, %v333
        %v336 = vmul.f32 %v331, %v334
        %337 = vst [vmem:[#allocation2 + $0x30] sm:$0xff] %v335
        %338 = vst [vmem:[#allocation2 + $0x38] sm:$0xff] %v336
        %339 = vst [vmem:[#allocation2 + $0x40] sm:$0xff] %v283
        %340 = vst [vmem:[#allocation2 + $0x48] sm:$0xff] %v284
        %341 = vrot.lane.b32.xlu0 %v283, 127
        %v342 = vpop.permute.xlu0 %341
        %343 = vrot.lane.b32.xlu0 %v284, 127
        %v344 = vpop.permute.xlu0 %343
        %vm345 = vcmp.lt.s32.totalorder %v290, 127
        %v346 = vsel %vm345, %v342, %v344
        %v347 = vsel %vm345, %v344, %v342
        %v348 = vld [vmem:[#allocation6 + $0x50] sm:$0xff]
        %v349 = vld [vmem:[#allocation6 + $0x58] sm:$0xff]
        %v350 = vmul.f32 %v346, %v348
        %v351 = vmul.f32 %v347, %v349
        %352 = vst [vmem:[#allocation2 + $0x50] sm:$0xff] %v350
        %353 = vst [vmem:[#allocation2 + $0x58] sm:$0xff] %v351
        %354 = vrot.lane.b32.xlu0 %v283, 113
        %v355 = vpop.permute.xlu0 %354
        %356 = vrot.lane.b32.xlu0 %v284, 113
        %v357 = vpop.permute.xlu0 %356
        %vm358 = vcmp.lt.s32.totalorder %v290, 113
        %v359 = vsel %vm358, %v355, %v357
        %v360 = vsel %vm358, %v357, %v355
        %v361 = vld [vmem:[#allocation6 + $0x60] sm:$0xff]
        %v362 = vld [vmem:[#allocation6 + $0x68] sm:$0xff]
        %v363 = vmul.f32 %v359, %v361
        %v364 = vmul.f32 %v360, %v362
        %365 = vst [vmem:[#allocation2 + $0x60] sm:$0xff] %v363
        %366 = vst [vmem:[#allocation2 + $0x68] sm:$0xff] %v364
        %367 = vrot.lane.b32.xlu0 %v283, 112
        %v368 = vpop.permute.xlu0 %367
        %369 = vrot.lane.b32.xlu0 %v284, 112
        %v370 = vpop.permute.xlu0 %369
        %vm371 = vcmp.lt.s32.totalorder %v290, 112
        %v372 = vsel %vm371, %v368, %v370
        %v373 = vsel %vm371, %v370, %v368
        %v374 = vld [vmem:[#allocation6 + $0x70] sm:$0xff]
        %v375 = vld [vmem:[#allocation6 + $0x78] sm:$0xff]
        %v376 = vmul.f32 %v372, %v374
        %v377 = vmul.f32 %v373, %v375
        %378 = vst [vmem:[#allocation2 + $0x70] sm:$0xff] %v376
        %379 = vst [vmem:[#allocation2 + $0x78] sm:$0xff] %v377
        %380 = vrot.lane.b32.xlu0 %v283, 111
        %v381 = vpop.permute.xlu0 %380
        %382 = vrot.lane.b32.xlu0 %v284, 111
        %v383 = vpop.permute.xlu0 %382
        %vm384 = vcmp.lt.s32.totalorder %v290, 111
        %v385 = vsel %vm384, %v381, %v383
        %v386 = vsel %vm384, %v383, %v381
        %v387 = vld [vmem:[#allocation6 + $0x80] sm:$0xff]
        %v388 = vld [vmem:[#allocation6 + $0x88] sm:$0xff]
        %v389 = vmul.f32 %v385, %v387
        %v390 = vmul.f32 %v386, %v388
        %391 = vst [vmem:[#allocation2 + $0x80] sm:$0xff] %v389
        %392 = vst [vmem:[#allocation2 + $0x88] sm:$0xff] %v390
        %v393 = vld [vmem:[#allocation8] sm:$0xff]
        %v394 = vld [vmem:[#allocation2] sm:$0xff]
        %v395 = vld [vmem:[#allocation2 + $0x8] sm:$0xff]
        %v396 = vld [vmem:[#allocation2 + $0x10] sm:$0xff]
        %v397 = vld [vmem:[#allocation2 + $0x18] sm:$0xff]
        %v398 = vld [vmem:[#allocation2 + $0x20] sm:$0xff]
        %v399 = vld [vmem:[#allocation2 + $0x28] sm:$0xff]
        %v400 = vld [vmem:[#allocation2 + $0x30] sm:$0xff]
        %v401 = vld [vmem:[#allocation2 + $0x38] sm:$0xff]
        %v402 = vld [vmem:[#allocation2 + $0x40] sm:$0xff]
        %v403 = vld [vmem:[#allocation2 + $0x48] sm:$0xff]
        %v404 = vld [vmem:[#allocation2 + $0x50] sm:$0xff]
        %v405 = vld [vmem:[#allocation2 + $0x58] sm:$0xff]
        %v406 = vld [vmem:[#allocation2 + $0x60] sm:$0xff]
        %v407 = vld [vmem:[#allocation2 + $0x68] sm:$0xff]
        %v408 = vld [vmem:[#allocation2 + $0x70] sm:$0xff]
        %v409 = vld [vmem:[#allocation2 + $0x78] sm:$0xff]
        %v410 = vld [vmem:[#allocation2 + $0x80] sm:$0xff]
        %v411 = vld [vmem:[#allocation2 + $0x88] sm:$0xff]
        %vm412 = vcmask 588800
        %v414 = vsel %vm412, %v393, 0
        %416 = vmatprep.subr.mxu0 %v395
        %417 = vmatpush1.msra.mxu0 %v394
        %418 = vmatprep.subr.mxu0 %v397
        %419 = vmatpush1.msra.mxu0 %v396
        %420 = vmatprep.subr.mxu0 %v399
        %421 = vmatpush1.msra.mxu0 %v398
        %422 = vmatprep.subr.mxu0 %v401
        %423 = vmatpush1.msra.mxu0 %v400
        %424 = vmatprep.subr.mxu0 %v403
        %425 = vmatpush1.msra.mxu0 %v402
        %426 = vmatprep.subr.mxu0 %v405
        %427 = vmatpush1.msra.mxu0 %v404
        %428 = vmatprep.subr.mxu0 %v407
        %429 = vmatpush1.msra.mxu0 %v406
        %430 = vmatprep.subr.mxu0 %v409
        %431 = vmatpush1.msra.mxu0 %v408
        %432 = vmatprep.subr.mxu0 %v411
        %433 = vmatpush1.msra.mxu0 %v410
        %434 = vmatprep.subr.mxu0 0.0
        %435 = vmatpush1.msra.mxu0 0.0
        %436 = vmatprep.subr.mxu0 0.0
        %437 = vmatpush1.msra.mxu0 0.0
        %438 = vmatprep.subr.mxu0 0.0
        %439 = vmatpush1.msra.mxu0 0.0
        %440 = vmatprep.subr.mxu0 0.0
        %441 = vmatpush1.msra.mxu0 0.0
        %442 = vmatprep.subr.mxu0 0.0
        %443 = vmatpush1.msra.mxu0 0.0
        %444 = vmatprep.subr.mxu0 0.0
        %445 = vmatpush1.msra.mxu0 0.0
        %446 = vmatprep.subr.mxu0 0.0
        %447 = vmatpush1.msra.mxu0 0.0
        %448 = vmatprep.subr.mxu0 0.0
        %449 = vmatpush1.msra.mxu0 0.0
        %450 = vmatprep.subr.mxu0 0.0
        %451 = vmatpush1.msra.mxu0 0.0
        %452 = vmatprep.subr.mxu0 0.0
        %453 = vmatpush1.msra.mxu0 0.0
        %454 = vmatprep.subr.mxu0 0.0
        %455 = vmatpush1.msra.mxu0 0.0
        %456 = vmatprep.subr.mxu0 0.0
        %457 = vmatpush1.msra.mxu0 0.0
        %458 = vmatprep.subr.mxu0 0.0
        %459 = vmatpush1.msra.mxu0 0.0
        %460 = vmatprep.subr.mxu0 0.0
        %461 = vmatpush1.msra.mxu0 0.0
        %462 = vmatprep.subr.mxu0 0.0
        %463 = vmatpush1.msra.mxu0 0.0
        %464 = vmatprep.subr.mxu0 0.0
        %465 = vmatpush1.msra.mxu0 0.0
        %466 = vmatprep.subr.mxu0 0.0
        %467 = vmatpush1.msra.mxu0 0.0
        %468 = vmatprep.subr.mxu0 0.0
        %469 = vmatpush1.msra.mxu0 0.0
        %470 = vmatprep.subr.mxu0 0.0
        %471 = vmatpush1.msra.mxu0 0.0
        %472 = vmatprep.subr.mxu0 0.0
        %473 = vmatpush1.msra.mxu0 0.0
        %474 = vmatprep.subr.mxu0 0.0
        %475 = vmatpush1.msra.mxu0 0.0
        %476 = vmatprep.subr.mxu0 0.0
        %477 = vmatpush1.msra.mxu0 0.0
        %478 = vmatprep.subr.mxu0 0.0
        %479 = vmatpush1.msra.mxu0 0.0
        %480 = vmatprep.mubr.f32.mxu0 0.0
        %481 = vmatmul.mubr.f32.gmra.mrb[0].mxu0 %v414
        %v482 = vpop.f32.mrb[0].mxu0
        %v483 = vadd.f32 0.0, %v482
        %v484 = vpop.f32.mrb[0].mxu0
        %v485 = vadd.f32 0.0, %v484
        %486 = vdwg.mxu0
        %vm487 = vcmp.gt.f32.partialorder %v483, 0.0
        %vm488 = vcmp.gt.f32.partialorder %v485, 0.0
        %v489 = vmul.f32 %v483, 0.2
        %v490 = vmul.f32 %v485, 0.2
        %v491 = vsel %vm487, %v483, %v489
        %v492 = vsel %vm488, %v485, %v490
        %493 = vrot.lane.b32.xlu0 %v491, 17
        %v494 = vpop.permute.xlu0 %493
        %495 = vrot.lane.b32.xlu0 %v492, 17
        %v496 = vpop.permute.xlu0 %495
        %v497 = vsel %vm291, %v494, %v496
        %v498 = vsel %vm291, %v496, %v494
        %v499 = vld [vmem:[#allocation6] sm:$0xff]
        %v500 = vld [vmem:[#allocation6 + $0x8] sm:$0xff]
        %v501 = vmul.f32 %v498, %v499
        %v502 = vmul.f32 %v497, %v500
        %503 = vst [vmem:[#allocation2] sm:$0xff] %v501
        %504 = vst [vmem:[#allocation2 + $0x8] sm:$0xff] %v502
        %505 = vrot.lane.b32.xlu0 %v491, 16
        %v506 = vpop.permute.xlu0 %505
        %507 = vrot.lane.b32.xlu0 %v492, 16
        %v508 = vpop.permute.xlu0 %507
        %v509 = vsel %vm304, %v506, %v508
        %v510 = vsel %vm304, %v508, %v506
        %v511 = vld [vmem:[#allocation6 + $0x10] sm:$0xff]
        %v512 = vld [vmem:[#allocation6 + $0x18] sm:$0xff]
        %v513 = vmul.f32 %v510, %v511
        %v514 = vmul.f32 %v509, %v512
        %515 = vst [vmem:[#allocation2 + $0x10] sm:$0xff] %v513
        %516 = vst [vmem:[#allocation2 + $0x18] sm:$0xff] %v514
        %517 = vrot.lane.b32.xlu0 %v491, 15
        %v518 = vpop.permute.xlu0 %517
        %519 = vrot.lane.b32.xlu0 %v492, 15
        %v520 = vpop.permute.xlu0 %519
        %v521 = vsel %vm317, %v518, %v520
        %v522 = vsel %vm317, %v520, %v518
        %v523 = vld [vmem:[#allocation6 + $0x20] sm:$0xff]
        %v524 = vld [vmem:[#allocation6 + $0x28] sm:$0xff]
        %v525 = vmul.f32 %v522, %v523
        %v526 = vmul.f32 %v521, %v524
        %527 = vst [vmem:[#allocation2 + $0x20] sm:$0xff] %v525
        %528 = vst [vmem:[#allocation2 + $0x28] sm:$0xff] %v526
        %529 = vrot.lane.b32.xlu0 %v491, 1
        %v530 = vpop.permute.xlu0 %529
        %531 = vrot.lane.b32.xlu0 %v492, 1
        %v532 = vpop.permute.xlu0 %531
        %v533 = vsel %vm330, %v530, %v532
        %v534 = vsel %vm330, %v532, %v530
        %v535 = vld [vmem:[#allocation6 + $0x30] sm:$0xff]
        %v536 = vld [vmem:[#allocation6 + $0x38] sm:$0xff]
        %v537 = vmul.f32 %v534, %v535
        %v538 = vmul.f32 %v533, %v536
        %539 = vst [vmem:[#allocation2 + $0x30] sm:$0xff] %v537
        %540 = vst [vmem:[#allocation2 + $0x38] sm:$0xff] %v538
        %541 = vst [vmem:[#allocation2 + $0x40] sm:$0xff] %v491
        %542 = vst [vmem:[#allocation2 + $0x48] sm:$0xff] %v492
        %543 = vrot.lane.b32.xlu0 %v491, 127
        %v544 = vpop.permute.xlu0 %543
        %545 = vrot.lane.b32.xlu0 %v492, 127
        %v546 = vpop.permute.xlu0 %545
        %v547 = vsel %vm345, %v544, %v546
        %v548 = vsel %vm345, %v546, %v544
        %v549 = vld [vmem:[#allocation6 + $0x50] sm:$0xff]
        %v550 = vld [vmem:[#allocation6 + $0x58] sm:$0xff]
        %v551 = vmul.f32 %v547, %v549
        %v552 = vmul.f32 %v548, %v550
        %553 = vst [vmem:[#allocation2 + $0x50] sm:$0xff] %v551
        %554 = vst [vmem:[#allocation2 + $0x58] sm:$0xff] %v552
        %555 = vrot.lane.b32.xlu0 %v491, 113
        %v556 = vpop.permute.xlu0 %555
        %557 = vrot.lane.b32.xlu0 %v492, 113
        %v558 = vpop.permute.xlu0 %557
        %v559 = vsel %vm358, %v556, %v558
        %v560 = vsel %vm358, %v558, %v556
        %v561 = vld [vmem:[#allocation6 + $0x60] sm:$0xff]
        %v562 = vld [vmem:[#allocation6 + $0x68] sm:$0xff]
        %v563 = vmul.f32 %v559, %v561
        %v564 = vmul.f32 %v560, %v562
        %565 = vst [vmem:[#allocation2 + $0x60] sm:$0xff] %v563
        %566 = vst [vmem:[#allocation2 + $0x68] sm:$0xff] %v564
        %567 = vrot.lane.b32.xlu0 %v491, 112
        %v568 = vpop.permute.xlu0 %567
        %569 = vrot.lane.b32.xlu0 %v492, 112
        %v570 = vpop.permute.xlu0 %569
        %v571 = vsel %vm371, %v568, %v570
        %v572 = vsel %vm371, %v570, %v568
        %v573 = vld [vmem:[#allocation6 + $0x70] sm:$0xff]
        %v574 = vld [vmem:[#allocation6 + $0x78] sm:$0xff]
        %v575 = vmul.f32 %v571, %v573
        %v576 = vmul.f32 %v572, %v574
        %577 = vst [vmem:[#allocation2 + $0x70] sm:$0xff] %v575
        %578 = vst [vmem:[#allocation2 + $0x78] sm:$0xff] %v576
        %579 = vrot.lane.b32.xlu0 %v491, 111
        %v580 = vpop.permute.xlu0 %579
        %581 = vrot.lane.b32.xlu0 %v492, 111
        %v582 = vpop.permute.xlu0 %581
        %v583 = vsel %vm384, %v580, %v582
        %v584 = vsel %vm384, %v582, %v580
        %v585 = vld [vmem:[#allocation6 + $0x80] sm:$0xff]
        %v586 = vld [vmem:[#allocation6 + $0x88] sm:$0xff]
        %v587 = vmul.f32 %v583, %v585
        %v588 = vmul.f32 %v584, %v586
        %589 = vst [vmem:[#allocation2 + $0x80] sm:$0xff] %v587
        %590 = vst [vmem:[#allocation2 + $0x88] sm:$0xff] %v588
        %v591 = vld [vmem:[%s3] sm:$0xff]
        %v592 = vld [vmem:[#allocation2] sm:$0xff]
        %v593 = vld [vmem:[#allocation2 + $0x8] sm:$0xff]
        %v594 = vld [vmem:[#allocation2 + $0x10] sm:$0xff]
        %v595 = vld [vmem:[#allocation2 + $0x18] sm:$0xff]
        %v596 = vld [vmem:[#allocation2 + $0x20] sm:$0xff]
        %v597 = vld [vmem:[#allocation2 + $0x28] sm:$0xff]
        %v598 = vld [vmem:[#allocation2 + $0x30] sm:$0xff]
        %v599 = vld [vmem:[#allocation2 + $0x38] sm:$0xff]
        %v600 = vld [vmem:[#allocation2 + $0x40] sm:$0xff]
        %v601 = vld [vmem:[#allocation2 + $0x48] sm:$0xff]
        %v602 = vld [vmem:[#allocation2 + $0x50] sm:$0xff]
        %v603 = vld [vmem:[#allocation2 + $0x58] sm:$0xff]
        %v604 = vld [vmem:[#allocation2 + $0x60] sm:$0xff]
        %v605 = vld [vmem:[#allocation2 + $0x68] sm:$0xff]
        %v606 = vld [vmem:[#allocation2 + $0x70] sm:$0xff]
        %v607 = vld [vmem:[#allocation2 + $0x78] sm:$0xff]
        %v608 = vld [vmem:[#allocation2 + $0x80] sm:$0xff]
        %v609 = vld [vmem:[#allocation2 + $0x88] sm:$0xff]
        %v611 = vsel %vm412, %v591, 0
        %613 = vmatprep.subr.mxu0 %v593
        %614 = vmatpush1.msra.mxu0 %v592
        %615 = vmatprep.subr.mxu0 %v595
        %616 = vmatpush1.msra.mxu0 %v594
        %617 = vmatprep.subr.mxu0 %v597
        %618 = vmatpush1.msra.mxu0 %v596
        %619 = vmatprep.subr.mxu0 %v599
        %620 = vmatpush1.msra.mxu0 %v598
        %621 = vmatprep.subr.mxu0 %v601
        %622 = vmatpush1.msra.mxu0 %v600
        %623 = vmatprep.subr.mxu0 %v603
        %624 = vmatpush1.msra.mxu0 %v602
        %625 = vmatprep.subr.mxu0 %v605
        %626 = vmatpush1.msra.mxu0 %v604
        %627 = vmatprep.subr.mxu0 %v607
        %628 = vmatpush1.msra.mxu0 %v606
        %629 = vmatprep.subr.mxu0 %v609
        %630 = vmatpush1.msra.mxu0 %v608
        %631 = vmatprep.subr.mxu0 0.0
        %632 = vmatpush1.msra.mxu0 0.0
        %633 = vmatprep.subr.mxu0 0.0
        %634 = vmatpush1.msra.mxu0 0.0
        %635 = vmatprep.subr.mxu0 0.0
        %636 = vmatpush1.msra.mxu0 0.0
        %637 = vmatprep.subr.mxu0 0.0
        %638 = vmatpush1.msra.mxu0 0.0
        %639 = vmatprep.subr.mxu0 0.0
        %640 = vmatpush1.msra.mxu0 0.0
        %641 = vmatprep.subr.mxu0 0.0
        %642 = vmatpush1.msra.mxu0 0.0
        %643 = vmatprep.subr.mxu0 0.0
        %644 = vmatpush1.msra.mxu0 0.0
        %645 = vmatprep.subr.mxu0 0.0
        %646 = vmatpush1.msra.mxu0 0.0
        %647 = vmatprep.subr.mxu0 0.0
        %648 = vmatpush1.msra.mxu0 0.0
        %649 = vmatprep.subr.mxu0 0.0
        %650 = vmatpush1.msra.mxu0 0.0
        %651 = vmatprep.subr.mxu0 0.0
        %652 = vmatpush1.msra.mxu0 0.0
        %653 = vmatprep.subr.mxu0 0.0
        %654 = vmatpush1.msra.mxu0 0.0
        %655 = vmatprep.subr.mxu0 0.0
        %656 = vmatpush1.msra.mxu0 0.0
        %657 = vmatprep.subr.mxu0 0.0
        %658 = vmatpush1.msra.mxu0 0.0
        %659 = vmatprep.subr.mxu0 0.0
        %660 = vmatpush1.msra.mxu0 0.0
        %661 = vmatprep.subr.mxu0 0.0
        %662 = vmatpush1.msra.mxu0 0.0
        %663 = vmatprep.subr.mxu0 0.0
        %664 = vmatpush1.msra.mxu0 0.0
        %665 = vmatprep.subr.mxu0 0.0
        %666 = vmatpush1.msra.mxu0 0.0
        %667 = vmatprep.subr.mxu0 0.0
        %668 = vmatpush1.msra.mxu0 0.0
        %669 = vmatprep.subr.mxu0 0.0
        %670 = vmatpush1.msra.mxu0 0.0
        %671 = vmatprep.subr.mxu0 0.0
        %672 = vmatpush1.msra.mxu0 0.0
        %673 = vmatprep.subr.mxu0 0.0
        %674 = vmatpush1.msra.mxu0 0.0
        %675 = vmatprep.subr.mxu0 0.0
        %676 = vmatpush1.msra.mxu0 0.0
        %677 = vmatprep.mubr.f32.mxu0 0.0
        %678 = vmatmul.mubr.f32.gmra.mrb[0].mxu0 %v611
        %v679 = vpop.f32.mrb[0].mxu0
        %v680 = vadd.f32 0.0, %v679
        %v681 = vpop.f32.mrb[0].mxu0
        %v682 = vadd.f32 0.0, %v681
        %683 = vdwg.mxu0
        %vm684 = vcmp.gt.f32.partialorder %v680, 0.0
        %vm685 = vcmp.gt.f32.partialorder %v682, 0.0
        %v686 = vmul.f32 %v680, 0.2
        %v687 = vmul.f32 %v682, 0.2
        %v688 = vsel %vm684, %v680, %v686
        %v689 = vsel %vm685, %v682, %v687
        %690 = vrot.lane.b32.xlu0 %v688, 17
        %v691 = vpop.permute.xlu0 %690
        %692 = vrot.lane.b32.xlu0 %v689, 17
        %v693 = vpop.permute.xlu0 %692
        %v694 = vsel %vm291, %v691, %v693
        %v695 = vsel %vm291, %v693, %v691
        %v696 = vld [vmem:[#allocation6] sm:$0xff]
        %v697 = vld [vmem:[#allocation6 + $0x8] sm:$0xff]
        %v698 = vmul.f32 %v695, %v696
        %v699 = vmul.f32 %v694, %v697
        %700 = vst [vmem:[#allocation2] sm:$0xff] %v698
        %701 = vst [vmem:[#allocation2 + $0x8] sm:$0xff] %v699
        %702 = vrot.lane.b32.xlu0 %v688, 16
        %v703 = vpop.permute.xlu0 %702
        %704 = vrot.lane.b32.xlu0 %v689, 16
        %v705 = vpop.permute.xlu0 %704
        %v706 = vsel %vm304, %v703, %v705
        %v707 = vsel %vm304, %v705, %v703
        %v708 = vld [vmem:[#allocation6 + $0x10] sm:$0xff]
        %v709 = vld [vmem:[#allocation6 + $0x18] sm:$0xff]
        %v710 = vmul.f32 %v707, %v708
        %v711 = vmul.f32 %v706, %v709
        %712 = vst [vmem:[#allocation2 + $0x10] sm:$0xff] %v710
        %713 = vst [vmem:[#allocation2 + $0x18] sm:$0xff] %v711
        %714 = vrot.lane.b32.xlu0 %v688, 15
        %v715 = vpop.permute.xlu0 %714
        %716 = vrot.lane.b32.xlu0 %v689, 15
        %v717 = vpop.permute.xlu0 %716
        %v718 = vsel %vm317, %v715, %v717
        %v719 = vsel %vm317, %v717, %v715
        %v720 = vld [vmem:[#allocation6 + $0x20] sm:$0xff]
        %v721 = vld [vmem:[#allocation6 + $0x28] sm:$0xff]
        %v722 = vmul.f32 %v719, %v720
        %v723 = vmul.f32 %v718, %v721
        %724 = vst [vmem:[#allocation2 + $0x20] sm:$0xff] %v722
        %725 = vst [vmem:[#allocation2 + $0x28] sm:$0xff] %v723
        %726 = vrot.lane.b32.xlu0 %v688, 1
        %v727 = vpop.permute.xlu0 %726
        %728 = vrot.lane.b32.xlu0 %v689, 1
        %v729 = vpop.permute.xlu0 %728
        %v730 = vsel %vm330, %v727, %v729
        %v731 = vsel %vm330, %v729, %v727
        %v732 = vld [vmem:[#allocation6 + $0x30] sm:$0xff]
        %v733 = vld [vmem:[#allocation6 + $0x38] sm:$0xff]
        %v734 = vmul.f32 %v731, %v732
        %v735 = vmul.f32 %v730, %v733
        %736 = vst [vmem:[#allocation2 + $0x30] sm:$0xff] %v734
        %737 = vst [vmem:[#allocation2 + $0x38] sm:$0xff] %v735
        %738 = vst [vmem:[#allocation2 + $0x40] sm:$0xff] %v688
        %739 = vst [vmem:[#allocation2 + $0x48] sm:$0xff] %v689
        %740 = vrot.lane.b32.xlu0 %v688, 127
        %v741 = vpop.permute.xlu0 %740
        %742 = vrot.lane.b32.xlu0 %v689, 127
        %v743 = vpop.permute.xlu0 %742
        %v744 = vsel %vm345, %v741, %v743
        %v745 = vsel %vm345, %v743, %v741
        %v746 = vld [vmem:[#allocation6 + $0x50] sm:$0xff]
        %v747 = vld [vmem:[#allocation6 + $0x58] sm:$0xff]
        %v748 = vmul.f32 %v744, %v746
        %v749 = vmul.f32 %v745, %v747
        %750 = vst [vmem:[#allocation2 + $0x50] sm:$0xff] %v748
        %751 = vst [vmem:[#allocation2 + $0x58] sm:$0xff] %v749
        %752 = vrot.lane.b32.xlu0 %v688, 113
        %v753 = vpop.permute.xlu0 %752
        %754 = vrot.lane.b32.xlu0 %v689, 113
        %v755 = vpop.permute.xlu0 %754
        %v756 = vsel %vm358, %v753, %v755
        %v757 = vsel %vm358, %v755, %v753
        %v758 = vld [vmem:[#allocation6 + $0x60] sm:$0xff]
        %v759 = vld [vmem:[#allocation6 + $0x68] sm:$0xff]
        %v760 = vmul.f32 %v756, %v758
        %v761 = vmul.f32 %v757, %v759
        %762 = vst [vmem:[#allocation2 + $0x60] sm:$0xff] %v760
        %763 = vst [vmem:[#allocation2 + $0x68] sm:$0xff] %v761
        %764 = vrot.lane.b32.xlu0 %v688, 112
        %v765 = vpop.permute.xlu0 %764
        %766 = vrot.lane.b32.xlu0 %v689, 112
        %v767 = vpop.permute.xlu0 %766
        %v768 = vsel %vm371, %v765, %v767
        %v769 = vsel %vm371, %v767, %v765
        %v770 = vld [vmem:[#allocation6 + $0x70] sm:$0xff]
        %v771 = vld [vmem:[#allocation6 + $0x78] sm:$0xff]
        %v772 = vmul.f32 %v768, %v770
        %v773 = vmul.f32 %v769, %v771
        %774 = vst [vmem:[#allocation2 + $0x70] sm:$0xff] %v772
        %775 = vst [vmem:[#allocation2 + $0x78] sm:$0xff] %v773
        %776 = vrot.lane.b32.xlu0 %v688, 111
        %v777 = vpop.permute.xlu0 %776
        %778 = vrot.lane.b32.xlu0 %v689, 111
        %v779 = vpop.permute.xlu0 %778
        %v780 = vsel %vm384, %v777, %v779
        %v781 = vsel %vm384, %v779, %v777
        %v782 = vld [vmem:[#allocation6 + $0x80] sm:$0xff]
        %v783 = vld [vmem:[#allocation6 + $0x88] sm:$0xff]
        %v784 = vmul.f32 %v780, %v782
        %v785 = vmul.f32 %v781, %v783
        %786 = vst [vmem:[#allocation2 + $0x80] sm:$0xff] %v784
        %787 = vst [vmem:[#allocation2 + $0x88] sm:$0xff] %v785
        %v788 = vld [vmem:[#allocation9] sm:$0xff]
        %v789 = vld [vmem:[#allocation2] sm:$0xff]
        %v790 = vld [vmem:[#allocation2 + $0x8] sm:$0xff]
        %v791 = vld [vmem:[#allocation2 + $0x10] sm:$0xff]
        %v792 = vld [vmem:[#allocation2 + $0x18] sm:$0xff]
        %v793 = vld [vmem:[#allocation2 + $0x20] sm:$0xff]
        %v794 = vld [vmem:[#allocation2 + $0x28] sm:$0xff]
        %v795 = vld [vmem:[#allocation2 + $0x30] sm:$0xff]
        %v796 = vld [vmem:[#allocation2 + $0x38] sm:$0xff]
        %v797 = vld [vmem:[#allocation2 + $0x40] sm:$0xff]
        %v798 = vld [vmem:[#allocation2 + $0x48] sm:$0xff]
        %v799 = vld [vmem:[#allocation2 + $0x50] sm:$0xff]
        %v800 = vld [vmem:[#allocation2 + $0x58] sm:$0xff]
        %v801 = vld [vmem:[#allocation2 + $0x60] sm:$0xff]
        %v802 = vld [vmem:[#allocation2 + $0x68] sm:$0xff]
        %v803 = vld [vmem:[#allocation2 + $0x70] sm:$0xff]
        %v804 = vld [vmem:[#allocation2 + $0x78] sm:$0xff]
        %v805 = vld [vmem:[#allocation2 + $0x80] sm:$0xff]
        %v806 = vld [vmem:[#allocation2 + $0x88] sm:$0xff]
        %v808 = vsel %vm412, %v788, 0
        %810 = vmatprep.subr.mxu0 %v790
        %811 = vmatpush1.msra.mxu0 %v789
        %812 = vmatprep.subr.mxu0 %v792
        %813 = vmatpush1.msra.mxu0 %v791
        %814 = vmatprep.subr.mxu0 %v794
        %815 = vmatpush1.msra.mxu0 %v793
        %816 = vmatprep.subr.mxu0 %v796
        %817 = vmatpush1.msra.mxu0 %v795
        %818 = vmatprep.subr.mxu0 %v798
        %819 = vmatpush1.msra.mxu0 %v797
        %820 = vmatprep.subr.mxu0 %v800
        %821 = vmatpush1.msra.mxu0 %v799
        %822 = vmatprep.subr.mxu0 %v802
        %823 = vmatpush1.msra.mxu0 %v801
        %824 = vmatprep.subr.mxu0 %v804
        %825 = vmatpush1.msra.mxu0 %v803
        %826 = vmatprep.subr.mxu0 %v806
        %827 = vmatpush1.msra.mxu0 %v805
        %828 = vmatprep.subr.mxu0 0.0
        %829 = vmatpush1.msra.mxu0 0.0
        %830 = vmatprep.subr.mxu0 0.0
        %831 = vmatpush1.msra.mxu0 0.0
        %832 = vmatprep.subr.mxu0 0.0
        %833 = vmatpush1.msra.mxu0 0.0
        %834 = vmatprep.subr.mxu0 0.0
        %835 = vmatpush1.msra.mxu0 0.0
        %836 = vmatprep.subr.mxu0 0.0
        %837 = vmatpush1.msra.mxu0 0.0
        %838 = vmatprep.subr.mxu0 0.0
        %839 = vmatpush1.msra.mxu0 0.0
        %840 = vmatprep.subr.mxu0 0.0
        %841 = vmatpush1.msra.mxu0 0.0
        %842 = vmatprep.subr.mxu0 0.0
        %843 = vmatpush1.msra.mxu0 0.0
        %844 = vmatprep.subr.mxu0 0.0
        %845 = vmatpush1.msra.mxu0 0.0
        %846 = vmatprep.subr.mxu0 0.0
        %847 = vmatpush1.msra.mxu0 0.0
        %848 = vmatprep.subr.mxu0 0.0
        %849 = vmatpush1.msra.mxu0 0.0
        %850 = vmatprep.subr.mxu0 0.0
        %851 = vmatpush1.msra.mxu0 0.0
        %852 = vmatprep.subr.mxu0 0.0
        %853 = vmatpush1.msra.mxu0 0.0
        %854 = vmatprep.subr.mxu0 0.0
        %855 = vmatpush1.msra.mxu0 0.0
        %856 = vmatprep.subr.mxu0 0.0
        %857 = vmatpush1.msra.mxu0 0.0
        %858 = vmatprep.subr.mxu0 0.0
        %859 = vmatpush1.msra.mxu0 0.0
        %860 = vmatprep.subr.mxu0 0.0
        %861 = vmatpush1.msra.mxu0 0.0
        %862 = vmatprep.subr.mxu0 0.0
        %863 = vmatpush1.msra.mxu0 0.0
        %864 = vmatprep.subr.mxu0 0.0
        %865 = vmatpush1.msra.mxu0 0.0
        %866 = vmatprep.subr.mxu0 0.0
        %867 = vmatpush1.msra.mxu0 0.0
        %868 = vmatprep.subr.mxu0 0.0
        %869 = vmatpush1.msra.mxu0 0.0
        %870 = vmatprep.subr.mxu0 0.0
        %871 = vmatpush1.msra.mxu0 0.0
        %872 = vmatprep.subr.mxu0 0.0
        %873 = vmatpush1.msra.mxu0 0.0
        %874 = vmatprep.mubr.f32.mxu0 0.0
        %875 = vmatmul.mubr.f32.gmra.mrb[0].mxu0 %v808
        %v876 = vpop.f32.mrb[0].mxu0
        %v877 = vadd.f32 0.0, %v876
        %v878 = vpop.f32.mrb[0].mxu0
        %v879 = vadd.f32 0.0, %v878
        %880 = vdwg.mxu0
        %v881 = vsub.f32 0.0, %v877
        %v882 = vsub.f32 0.0, %v879
        %v883 = vmul.f32 %v881, 1.442695
        %v884 = vpow.pop %v883
        %v885 = vmul.f32 %v882, 1.442695
        %v886 = vpow.pop %v885
        %v887 = vadd.f32 %v884, 1.0
        %v888 = vadd.f32 %v886, 1.0
        %v889 = vrcp.pop %v887
        %v890 = vmul.f32 1.0, %v889
        %v891 = vrcp.pop %v888
        %v892 = vmul.f32 1.0, %v891
        %v895 = vcombine.low %v890, %v892
        %v897 = vunpack.c.l.s4 1966171168
        %v898 = vunpack.c.0.s8 %v897
        %v899 = vlaneseq
        %v900 = vshrl.u32 %v899, 7
        %v901 = vsub.s32 %v898, %v900
        %v902 = vrot.slane %v895, %v901
        %v904 = vunpack.c.l.s4 1966171168
        %v905 = vunpack.c.0.s8 %v904
        %v906 = vlaneseq
        %v907 = vshrl.u32 %v906, 7
        %v908 = vsub.s32 %v905, %v907
        %v909 = vrot.slane %v902, %v908
        %v911 = vlaneseq
        %vm912 = vcmp.ge.s32.totalorder %v911, 0
        %vm913 = vcmp.lt.s32.totalorder %v911, 256
        %vm914 = vmand %vm912, %vm913
        %915 = vst.msk [vmem:[%s280] sm:$0x3] %vm914, %v909
        %s916 = sand.u32 %s142, 1
        %s917 = scalar_lea.sflag [#allocation5], %s916
        %s918 = sand.u32 %s142, 1
        %s919 = smul.addr %s918, 2
        %s920 = scalar_lea.vmem [#allocation11], %s919
        // Predicated region
        $region57: #{tpu_custom_call.1} parent=39 // pred_check
          %p921 = pneg %p152
        $region58: #{tpu_custom_call.1} parent=39 // pred_check_branch
          %923 = sbr.rel (%p921) target = $region60
        $region59: #{tpu_custom_call.1} parent=39 // pred_region
          %s924 = smul.u32 2, %s24
          %s926 = ssub.s32 32, 32
          %927 = vsyncadd %s917, %s926
          %s928 = smul.addr %s924, 16
          %s929 = scalar_lea.hbm %s5, %s928
          %s931 = sshll.u32 %s920, 4
          %s932 = int_to_ptr.vmem [resolvable:$true] %s931
          %934 = dma.vmem_to_hbm [thread:$0]  %s932, 32, %s929, %s917
        $region60: #{tpu_custom_call.1} parent=39 // pred_fallthru
          _
      $region40: #{tpu_custom_call.1} parent=5 // pred_fallthru
        _
      %p935 = scmp.le.s32.totalorder 2, %s19
      // Predicated region
      $region61: #{tpu_custom_call.1} parent=5 // pred_check
        %p936 = pneg %p935
      $region62: #{tpu_custom_call.1} parent=5 // pred_check_branch
        %938 = sbr.rel (%p936) target = $region64
      $region63: #{tpu_custom_call.1} parent=5 // pred_region
        %s939 = ssub.s32 %s19, 2
        // Predicated region
        $region65: #{tpu_custom_call.1} parent=63 // pred_check
          %p940 = pneg %p158
        $region66: #{tpu_custom_call.1} parent=63 // pred_check_branch
          %942 = sbr.rel (%p940) target = $region68
        $region67: #{tpu_custom_call.1} parent=63 // pred_region
          %s943 = sand.u32 %s143, 1
          %s944 = scalar_lea.sflag [#allocation5], %s943
          %s945 = sand.u32 %s143, 1
          %s946 = smul.addr %s945, 2
          %s947 = scalar_lea.vmem [#allocation11], %s946
          %948 = dma.done %s944, 32
        $region68: #{tpu_custom_call.1} parent=63 // pred_fallthru
          _
      $region64: #{tpu_custom_call.1} parent=5 // pred_fallthru
        _
    $region6: #{tpu_custom_call.1} parent=1 // loop_footer
      %s23 = sadd.s32 1, %s19
    $region7: #{tpu_custom_call.1} parent=1 // loop_footer_branch
      %18 = sbr.rel target = $region3
    $region8: #{tpu_custom_call.1} parent=1 // loop_exit
      _
    %949 = vsyncpa [#allocation4], 1
    %s950 = scalar_lea.sflag [#allocation4], 1
    %951 = vsyncpa %s950, 1
    %952 = vsyncpa [#allocation7], 1
    %953 = vsyncpa [#allocation10], 1
    %954 = vsyncpa [#allocation5], 1
    %s955 = scalar_lea.sflag [#allocation5], 1
    %956 = vsyncpa %s955, 1

</llo_original>
